<compile_context>
chip_gen: v7x
topology: tpu7x:2x2x1
jax: 0.10.0
libtpu: 0.0.40
codegen_flags: <defaults>
</compile_context>

<pallas_src>
from functools import partial

import numpy as np
import jax
import jax.numpy as jnp
from jax.experimental import pallas as pl
from jax.experimental.pallas import tpu as pltpu


# ----------------------------- Pallas kernel -------------------------------

def _fused_kernel(x_ref, w_ref, b_ref, o_ref, *, caps_dims):
    """One batch element of the fused deconv + (degenerate) routing forward.

    x_ref: (H*W, Cin)   im2row'd capsule input for this batch element
    w_ref: (Cin, N)     packed deconv weight, N = Mout*2*2*Dout, cols=(m,di,dj,d)
    b_ref: (1, N)       matching bias
    o_ref: (H*W, N)     prediction/output block, rows=(i,j), cols=(m,di,dj,d)
    """
    Dout = caps_dims
    N = o_ref.shape[-1]
    nseg = N // Dout                                   # capsules per pixel

    # single lane-dense GEMM on the MXU (whole step), + bias
    y = jnp.dot(x_ref[...], w_ref[...], preferred_element_type=jnp.float32)
    y = y + b_ref[...]                                 # (H*W, N)

    # Agreement routing degenerates to one squash per Dout-lane capsule
    # segment (softmax(b) sums to 1 over the singleton caps-in axis of pred).
    # squash(s) = (|s|^2 / (1+|s|^2)) * s / sqrt(|s|^2 + eps)
    parts = []
    for k in range(nseg):                              # 8 static 16-lane slices
        s = y[:, k * Dout:(k + 1) * Dout]
        sq = jnp.sum(s * s, axis=-1, keepdims=True)
        parts.append(s * (sq / ((1.0 + sq) * jnp.sqrt(sq + 1e-7))))

    # one unmasked, lane-dense (H*W, N) = (64, 128) whole-block store
    o_ref[...] = jnp.concatenate(parts, axis=-1)


# ----------------------------- parameter prep -------------------------------

def prepare_params(W_deconv, bias_deconv, Mout, Dout):
    """One-time parameter re-layout (call at load time, not per forward).

    w_mat[cin, ((m*2+di)*2+dj)*Dout + d] = W_deconv[cin, m*Dout + d, di, dj]
    bias_mat[0, (m,di,dj,d)]             = bias_deconv[m*Dout + d]
    """
    Cin, Cout, kh, kw = W_deconv.shape
    # Routing collapse in the kernel is exact iff the caps-in axis of the
    # prediction tensor (the module's `.view(..., -1)`) is exactly 1:
    assert Cout == Mout * Dout, "collapsed caps-in axis of pred must be 1"
    assert (kh, kw) == (2, 2), "kernel only implements 2x2 stride-2 deconv"
    C2 = 2 * Dout
    N = Mout * 2 * C2
    w_mat = jnp.transpose(
        W_deconv.reshape(Cin, Mout, Dout, 2, 2), (0, 1, 3, 4, 2)
    ).reshape(Cin, N)
    bias_mat = jnp.broadcast_to(
        bias_deconv.reshape(Mout, 1, 1, Dout), (Mout, 2, 2, Dout)
    ).reshape(1, N)
    return w_mat, bias_mat


# ----------------------------- wrapper ---------------------------------------

@partial(jax.jit, static_argnames=("Mout", "Dout"))
def get_abstract_caps_up(x, w_mat, bias_mat, b_routing, *, Mout, Dout):
    """Forward pass of Get_Abstract_Caps_Up (deconv, stride=2, kernel=2, pad=0).

    Returns (B, Mout, 2*H, 2*W, Dout), matching the PyTorch module.
    `b_routing` is accepted for interface fidelity but provably has no effect
    on the output (the routing collapses exactly; see prepare_params assert).
    """
    B, Min, H, Wd, Din = x.shape
    Cin = Min * Din
    N = Mout * 2 * 2 * Dout
    del b_routing  # routing logits cancel exactly (caps-in axis is a singleton)

    # one tiny (~16 KiB) XLA transpose so the kernel issues a single K=Cin GEMM:
    # (B, Min, H, W, Din) -> (B, H*W, Min*Din), rows=(i,j), cols=(mi,din)
    x_mat = jnp.transpose(x, (0, 2, 3, 1, 4)).reshape(B, H * Wd, Cin)

    out = pl.pallas_call(
        partial(_fused_kernel, caps_dims=Dout),
        out_shape=jax.ShapeDtypeStruct((B, H * Wd, N), jnp.float32),
        grid=(B,),                                   # 2 steps, one per core on v7x
        in_specs=[
            # per-batch-element input rows: (H*W, Cin) = (64, 32)
            pl.BlockSpec((None, H * Wd, Cin), lambda b: (b, 0, 0)),
            # packed weight, whole (Cin, N) = (32, 128), resident across steps
            pl.BlockSpec((Cin, N), lambda b: (0, 0)),
            # packed bias (1, N)
            pl.BlockSpec((1, N), lambda b: (0, 0)),
        ],
        # per-batch-element output block: (H*W, N) = (64, 128), lane-dense
        out_specs=pl.BlockSpec((None, H * Wd, N), lambda b: (b, 0, 0)),
        compiler_params=pltpu.CompilerParams(
            dimension_semantics=("parallel",)),
    )(x_mat, w_mat, bias_mat)

    # col2im scatter of the stride-2 deconv: one tiny (64 KiB) XLA transpose,
    # everything else is a free row-major reshape.
    out = out.reshape(B, H, Wd, Mout, 2, 2, Dout)          # (b, i, j, m, di, dj, d)
    out = jnp.transpose(out, (0, 3, 1, 4, 2, 5, 6))        # (b, m, i, di, j, dj, d)
    return out.reshape(B, Mout, 2 * H, 2 * Wd, Dout)


# ----------------------------- pure-JAX reference ---------------------------

def reference(x, W_deconv, bias_deconv, b_routing, Mout, Dout):
    """Faithful translation of the PyTorch module (full routing iterations)."""
    B, Min, H, Wd, Din = x.shape
    Cin, Cout = Min * Din, Mout * Dout
    Hn, Wn = 2 * H, 2 * Wd

    def squash(s, eps=1e-7):
        sq = jnp.sum(s * s, axis=-1)
        sn = jnp.sqrt(sq + eps)
        return (sq / (1.0 + sq))[..., None] * (s / sn[..., None])

    xp = jnp.transpose(x, (0, 1, 4, 2, 3)).reshape(B, Cin, H, Wd)
    y = jnp.einsum('bcij,cokl->bijokl', xp, W_deconv)
    y = y + bias_deconv[None, None, None, :, None, None]
    out = jnp.transpose(y, (0, 3, 1, 4, 2, 5)).reshape(B, Cout, Hn, Wn)

    pred = jnp.transpose(out.reshape(B, Mout, Dout, Hn, Wn),
                         (0, 1, 3, 4, 2))[..., None, :]      # (B,M,Hn,Wn,1,D)
    b0 = b_routing
    c = jax.nn.softmax(b0, axis=-1)
    v = squash((c[..., None] * pred).sum(-2))
    bb = b0
    for _ in range(2):                                        # num_iterations=2
        bb = bb + (pred * v[..., None, :]).sum(-1)
        c = jax.nn.softmax(bb, axis=-1)
        v = squash((pred * c[..., None]).sum(-2))
    return v


# ----------------------------- main ------------------------------------------

if __name__ == "__main__":
    # module config (constructor args): deconv path, no smoothing
    B = 2
    Min_, Din = 4, 8          # capsin_n_maps, capsin_n_dims
    Mout, Dout = 2, 16        # capsout_n_maps, capsout_n_dims
    H = Wd = 8                # old_h, old_w
    Hn, Wn = 2 * H, 2 * Wd    # y_kernel=x_kernel=2, stride=2, pad=(0,0)
    Cin, Cout = Min_ * Din, Mout * Dout

    key = jax.random.PRNGKey(0)
    kx, kw, kb = jax.random.split(key, 3)

    x = jax.random.normal(kx, (B, Min_, H, Wd, Din), dtype=jnp.float32)

    # deterministic parameter init (ConvTranspose2d weight/bias, routing b=0)
    stdv = 1.0 / np.sqrt(Cin * 2 * 2)
    W_deconv = jax.random.uniform(kw, (Cin, Cout, 2, 2), jnp.float32,
                                  minval=-stdv, maxval=stdv)
    bias_deconv = jax.random.uniform(kb, (Cout,), jnp.float32,
                                     minval=-stdv, maxval=stdv)
    b_routing = jnp.zeros((1, Mout, Hn, Wn, Min_), dtype=jnp.float32)

    # one-time parameter packing (load-time, outside the jitted forward)
    w_mat, bias_mat = prepare_params(W_deconv, bias_deconv, Mout, Dout)

    out = get_abstract_caps_up(x, w_mat, bias_mat, b_routing,
                               Mout=Mout, Dout=Dout)
    out = jax.block_until_ready(out)

    ref = reference(x, W_deconv, bias_deconv, b_routing, Mout, Dout)
    assert out.shape == (B, Mout, Hn, Wn, Dout), out.shape
    np.testing.assert_allclose(np.asarray(out), np.asarray(ref),
                               rtol=1e-5, atol=1e-5)
    print("KERNEL_OK")
</pallas_src>

<mosaic_0001>
module attributes {stable_mosaic.version = 11 : i64} {
  func.func @_fused_kernel(%arg0: i32, %arg1: memref<1x64x32xf32, #tpu.memory_space<vmem>>, %arg2: memref<32x128xf32, #tpu.memory_space<vmem>>, %arg3: memref<1x128xf32, #tpu.memory_space<vmem>>, %arg4: memref<1x64x128xf32, #tpu.memory_space<vmem>>) attributes {dimension_semantics = [#tpu.dimension_semantics<parallel>], iteration_bounds = array<i64: 2>, scalar_prefetch = 0 : i64, scratch_operands = 0 : i64, tpu.core_type = #tpu.core_type<tc>, window_params = [{transform_indices = @transform_0, window_bounds = array<i64: 1, 64, 32>}, {pipeline_mode = #tpu.pipeline_mode<synchronous>, transform_indices = @transform_1, window_bounds = array<i64: 32, 128>}, {pipeline_mode = #tpu.pipeline_mode<synchronous>, transform_indices = @transform_2, window_bounds = array<i64: 1, 128>}, {transform_indices = @transform_3, window_bounds = array<i64: 1, 64, 128>}]} {
    %c0 = arith.constant 0 : index
    %c0_0 = arith.constant 0 : index
    %c0_1 = arith.constant 0 : index
    %0 = vector.load %arg1[%c0, %c0_0, %c0_1] : memref<1x64x32xf32, #tpu.memory_space<vmem>>, vector<1x64x32xf32>
    %1 = vector.shape_cast %0 : vector<1x64x32xf32> to vector<64x32xf32>
    %c0_2 = arith.constant 0 : index
    %c0_3 = arith.constant 0 : index
    %2 = vector.load %arg2[%c0_2, %c0_3] : memref<32x128xf32, #tpu.memory_space<vmem>>, vector<32x128xf32>
    %cst = arith.constant dense<0.000000e+00> : vector<64x128xf32>
    %3 = tpu.matmul %1, %2, %cst {dimension_numbers = #tpu.dot_dimension_numbers<[1], [0], [0], [1], [0, 0, 1, 1], [], []>} : vector<64x32xf32>, vector<32x128xf32>, vector<64x128xf32> -> vector<64x128xf32>
    %c0_4 = arith.constant 0 : index
    %c0_5 = arith.constant 0 : index
    %4 = vector.load %arg3[%c0_4, %c0_5] : memref<1x128xf32, #tpu.memory_space<vmem>>, vector<1x128xf32>
    %5 = vector.broadcast %4 : vector<1x128xf32> to vector<64x128xf32>
    %6 = arith.addf %3, %5 : vector<64x128xf32>
    %7 = vector.extract_strided_slice %6 {offsets = [0, 0], sizes = [64, 16], strides = [1, 1]} : vector<64x128xf32> to vector<64x16xf32>
    %8 = arith.mulf %7, %7 : vector<64x16xf32>
    %cst_6 = arith.constant dense<0.000000e+00> : vector<64xf32>
    %9 = vector.multi_reduction <add>, %8, %cst_6 [1] : vector<64x16xf32> to vector<64xf32>
    %10 = vector.shape_cast %9 : vector<64xf32> to vector<64x1xf32>
    %cst_7 = arith.constant 1.000000e+00 : f32
    %11 = vector.broadcast %cst_7 : f32 to vector<64x1xf32>
    %12 = arith.addf %11, %10 : vector<64x1xf32>
    %cst_8 = arith.constant 1.000000e-07 : f32
    %13 = vector.broadcast %cst_8 : f32 to vector<64x1xf32>
    %14 = arith.addf %10, %13 : vector<64x1xf32>
    %15 = math.sqrt %14 : vector<64x1xf32>
    %16 = arith.mulf %12, %15 : vector<64x1xf32>
    %17 = arith.divf %10, %16 : vector<64x1xf32>
    %18 = vector.broadcast %17 : vector<64x1xf32> to vector<64x16xf32>
    %19 = arith.mulf %7, %18 : vector<64x16xf32>
    %20 = vector.extract_strided_slice %6 {offsets = [0, 16], sizes = [64, 16], strides = [1, 1]} : vector<64x128xf32> to vector<64x16xf32>
    %21 = arith.mulf %20, %20 : vector<64x16xf32>
    %cst_9 = arith.constant dense<0.000000e+00> : vector<64xf32>
    %22 = vector.multi_reduction <add>, %21, %cst_9 [1] : vector<64x16xf32> to vector<64xf32>
    %23 = vector.shape_cast %22 : vector<64xf32> to vector<64x1xf32>
    %cst_10 = arith.constant 1.000000e+00 : f32
    %24 = vector.broadcast %cst_10 : f32 to vector<64x1xf32>
    %25 = arith.addf %24, %23 : vector<64x1xf32>
    %cst_11 = arith.constant 1.000000e-07 : f32
    %26 = vector.broadcast %cst_11 : f32 to vector<64x1xf32>
    %27 = arith.addf %23, %26 : vector<64x1xf32>
    %28 = math.sqrt %27 : vector<64x1xf32>
    %29 = arith.mulf %25, %28 : vector<64x1xf32>
    %30 = arith.divf %23, %29 : vector<64x1xf32>
    %31 = vector.broadcast %30 : vector<64x1xf32> to vector<64x16xf32>
    %32 = arith.mulf %20, %31 : vector<64x16xf32>
    %33 = vector.extract_strided_slice %6 {offsets = [0, 32], sizes = [64, 16], strides = [1, 1]} : vector<64x128xf32> to vector<64x16xf32>
    %34 = arith.mulf %33, %33 : vector<64x16xf32>
    %cst_12 = arith.constant dense<0.000000e+00> : vector<64xf32>
    %35 = vector.multi_reduction <add>, %34, %cst_12 [1] : vector<64x16xf32> to vector<64xf32>
    %36 = vector.shape_cast %35 : vector<64xf32> to vector<64x1xf32>
    %cst_13 = arith.constant 1.000000e+00 : f32
    %37 = vector.broadcast %cst_13 : f32 to vector<64x1xf32>
    %38 = arith.addf %37, %36 : vector<64x1xf32>
    %cst_14 = arith.constant 1.000000e-07 : f32
    %39 = vector.broadcast %cst_14 : f32 to vector<64x1xf32>
    %40 = arith.addf %36, %39 : vector<64x1xf32>
    %41 = math.sqrt %40 : vector<64x1xf32>
    %42 = arith.mulf %38, %41 : vector<64x1xf32>
    %43 = arith.divf %36, %42 : vector<64x1xf32>
    %44 = vector.broadcast %43 : vector<64x1xf32> to vector<64x16xf32>
    %45 = arith.mulf %33, %44 : vector<64x16xf32>
    %46 = vector.extract_strided_slice %6 {offsets = [0, 48], sizes = [64, 16], strides = [1, 1]} : vector<64x128xf32> to vector<64x16xf32>
    %47 = arith.mulf %46, %46 : vector<64x16xf32>
    %cst_15 = arith.constant dense<0.000000e+00> : vector<64xf32>
    %48 = vector.multi_reduction <add>, %47, %cst_15 [1] : vector<64x16xf32> to vector<64xf32>
    %49 = vector.shape_cast %48 : vector<64xf32> to vector<64x1xf32>
    %cst_16 = arith.constant 1.000000e+00 : f32
    %50 = vector.broadcast %cst_16 : f32 to vector<64x1xf32>
    %51 = arith.addf %50, %49 : vector<64x1xf32>
    %cst_17 = arith.constant 1.000000e-07 : f32
    %52 = vector.broadcast %cst_17 : f32 to vector<64x1xf32>
    %53 = arith.addf %49, %52 : vector<64x1xf32>
    %54 = math.sqrt %53 : vector<64x1xf32>
    %55 = arith.mulf %51, %54 : vector<64x1xf32>
    %56 = arith.divf %49, %55 : vector<64x1xf32>
    %57 = vector.broadcast %56 : vector<64x1xf32> to vector<64x16xf32>
    %58 = arith.mulf %46, %57 : vector<64x16xf32>
    %59 = vector.extract_strided_slice %6 {offsets = [0, 64], sizes = [64, 16], strides = [1, 1]} : vector<64x128xf32> to vector<64x16xf32>
    %60 = arith.mulf %59, %59 : vector<64x16xf32>
    %cst_18 = arith.constant dense<0.000000e+00> : vector<64xf32>
    %61 = vector.multi_reduction <add>, %60, %cst_18 [1] : vector<64x16xf32> to vector<64xf32>
    %62 = vector.shape_cast %61 : vector<64xf32> to vector<64x1xf32>
    %cst_19 = arith.constant 1.000000e+00 : f32
    %63 = vector.broadcast %cst_19 : f32 to vector<64x1xf32>
    %64 = arith.addf %63, %62 : vector<64x1xf32>
    %cst_20 = arith.constant 1.000000e-07 : f32
    %65 = vector.broadcast %cst_20 : f32 to vector<64x1xf32>
    %66 = arith.addf %62, %65 : vector<64x1xf32>
    %67 = math.sqrt %66 : vector<64x1xf32>
    %68 = arith.mulf %64, %67 : vector<64x1xf32>
    %69 = arith.divf %62, %68 : vector<64x1xf32>
    %70 = vector.broadcast %69 : vector<64x1xf32> to vector<64x16xf32>
    %71 = arith.mulf %59, %70 : vector<64x16xf32>
    %72 = vector.extract_strided_slice %6 {offsets = [0, 80], sizes = [64, 16], strides = [1, 1]} : vector<64x128xf32> to vector<64x16xf32>
    %73 = arith.mulf %72, %72 : vector<64x16xf32>
    %cst_21 = arith.constant dense<0.000000e+00> : vector<64xf32>
    %74 = vector.multi_reduction <add>, %73, %cst_21 [1] : vector<64x16xf32> to vector<64xf32>
    %75 = vector.shape_cast %74 : vector<64xf32> to vector<64x1xf32>
    %cst_22 = arith.constant 1.000000e+00 : f32
    %76 = vector.broadcast %cst_22 : f32 to vector<64x1xf32>
    %77 = arith.addf %76, %75 : vector<64x1xf32>
    %cst_23 = arith.constant 1.000000e-07 : f32
    %78 = vector.broadcast %cst_23 : f32 to vector<64x1xf32>
    %79 = arith.addf %75, %78 : vector<64x1xf32>
    %80 = math.sqrt %79 : vector<64x1xf32>
    %81 = arith.mulf %77, %80 : vector<64x1xf32>
    %82 = arith.divf %75, %81 : vector<64x1xf32>
    %83 = vector.broadcast %82 : vector<64x1xf32> to vector<64x16xf32>
    %84 = arith.mulf %72, %83 : vector<64x16xf32>
    %85 = vector.extract_strided_slice %6 {offsets = [0, 96], sizes = [64, 16], strides = [1, 1]} : vector<64x128xf32> to vector<64x16xf32>
    %86 = arith.mulf %85, %85 : vector<64x16xf32>
    %cst_24 = arith.constant dense<0.000000e+00> : vector<64xf32>
    %87 = vector.multi_reduction <add>, %86, %cst_24 [1] : vector<64x16xf32> to vector<64xf32>
    %88 = vector.shape_cast %87 : vector<64xf32> to vector<64x1xf32>
    %cst_25 = arith.constant 1.000000e+00 : f32
    %89 = vector.broadcast %cst_25 : f32 to vector<64x1xf32>
    %90 = arith.addf %89, %88 : vector<64x1xf32>
    %cst_26 = arith.constant 1.000000e-07 : f32
    %91 = vector.broadcast %cst_26 : f32 to vector<64x1xf32>
    %92 = arith.addf %88, %91 : vector<64x1xf32>
    %93 = math.sqrt %92 : vector<64x1xf32>
    %94 = arith.mulf %90, %93 : vector<64x1xf32>
    %95 = arith.divf %88, %94 : vector<64x1xf32>
    %96 = vector.broadcast %95 : vector<64x1xf32> to vector<64x16xf32>
    %97 = arith.mulf %85, %96 : vector<64x16xf32>
    %98 = vector.extract_strided_slice %6 {offsets = [0, 112], sizes = [64, 16], strides = [1, 1]} : vector<64x128xf32> to vector<64x16xf32>
    %99 = arith.mulf %98, %98 : vector<64x16xf32>
    %cst_27 = arith.constant dense<0.000000e+00> : vector<64xf32>
    %100 = vector.multi_reduction <add>, %99, %cst_27 [1] : vector<64x16xf32> to vector<64xf32>
    %101 = vector.shape_cast %100 : vector<64xf32> to vector<64x1xf32>
    %cst_28 = arith.constant 1.000000e+00 : f32
    %102 = vector.broadcast %cst_28 : f32 to vector<64x1xf32>
    %103 = arith.addf %102, %101 : vector<64x1xf32>
    %cst_29 = arith.constant 1.000000e-07 : f32
    %104 = vector.broadcast %cst_29 : f32 to vector<64x1xf32>
    %105 = arith.addf %101, %104 : vector<64x1xf32>
    %106 = math.sqrt %105 : vector<64x1xf32>
    %107 = arith.mulf %103, %106 : vector<64x1xf32>
    %108 = arith.divf %101, %107 : vector<64x1xf32>
    %109 = vector.broadcast %108 : vector<64x1xf32> to vector<64x16xf32>
    %110 = arith.mulf %98, %109 : vector<64x16xf32>
    %111 = tpu.concatenate %19, %32, %45, %58, %71, %84, %97, %110 in 1 : vector<64x16xf32>, vector<64x16xf32>, vector<64x16xf32>, vector<64x16xf32>, vector<64x16xf32>, vector<64x16xf32>, vector<64x16xf32>, vector<64x16xf32> -> vector<64x128xf32>
    %c0_30 = arith.constant 0 : index
    %c0_31 = arith.constant 0 : index
    %c0_32 = arith.constant 0 : index
    %112 = vector.load %arg4[%c0_30, %c0_31, %c0_32] : memref<1x64x128xf32, #tpu.memory_space<vmem>>, vector<1x64x128xf32>
    %113 = vector.shape_cast %112 : vector<1x64x128xf32> to vector<64x128xf32>
    %114 = vector.shape_cast %111 : vector<64x128xf32> to vector<1x64x128xf32>
    tpu.vector_store %arg4[%c0_30, %c0_31, %c0_32], %114 {strides = array<i32>} : memref<1x64x128xf32, #tpu.memory_space<vmem>>, vector<1x64x128xf32>,
    return
  }
  func.func @transform_0(%arg0: i32) -> (i32, i32, i32) {
    %c0_i32 = arith.constant 0 : i32
    %c0_i32_0 = arith.constant 0 : i32
    %c0_i32_1 = arith.constant 0 : i32
    return %arg0, %c0_i32, %c0_i32_0 : i32, i32, i32
  }
  func.func @transform_1(%arg0: i32) -> (i32, i32) {
    %c0_i32 = arith.constant 0 : i32
    %c0_i32_0 = arith.constant 0 : i32
    %c0_i32_1 = arith.constant 0 : i32
    return %c0_i32, %c0_i32_0 : i32, i32
  }
  func.func @transform_2(%arg0: i32) -> (i32, i32) {
    %c0_i32 = arith.constant 0 : i32
    %c0_i32_0 = arith.constant 0 : i32
    %c0_i32_1 = arith.constant 0 : i32
    return %c0_i32, %c0_i32_0 : i32, i32
  }
  func.func @transform_3(%arg0: i32) -> (i32, i32, i32) {
    %c0_i32 = arith.constant 0 : i32
    %c0_i32_0 = arith.constant 0 : i32
    %c0_i32_1 = arith.constant 0 : i32
    return %arg0, %c0_i32, %c0_i32_0 : i32, i32, i32
  }
}

</mosaic_0001>

<llo_original>
// kernel: get_abstract_caps_up.1
$region0: #{get_abstract_caps_up.1}
  #allocation0 [shape = 'u32[]', space=smem, size = 0x4, offset = 0x4, fixed_abs, tag = 'smem constant byte address 0x4 - core index']
  #allocation1 [shape = 'u32[144,128]{1,0:T(1,128)}', space=vmem, size = 0x12000, scoped, tag = 'internal scratch']
  %s0 = inlined_call_operand.vmem [shape: f32[2,64,32], index: 0, kind: input, shape index: {}]
  %s1 = inlined_call_operand.vmem [shape: f32[32,128], index: 1, kind: input, shape index: {}]
  %s2 = inlined_call_operand.vmem [shape: f32[1,128], index: 2, kind: input, shape index: {}]
  %s3 = inlined_call_operand.vmem [shape: f32[2,64,128], index: 3, kind: output, shape index: {}]
  %s4 = sld [smem:[#allocation0]]
  $region45: #{get_abstract_caps_up.1} parent=0
    _
  %s6 = ssub.s32 1, %s4
  %s7 = scalar_select 0, %s6, %s4
  loop: start=0, step=1, limit=4
  $region2: #{get_abstract_caps_up.1} parent=0 // loop_pre_header
    _
  $region3: #{get_abstract_caps_up.1} parent=0 // loop_header
    %s9 = sphi 0, %s13
    %p10 = scmp.ge.s32.totalorder %s9, 4
    %s19 = sphi 0, %s21
    %s22 = sphi 0, %s19
    %s23 = sphi 0, %s22
    %s39 = sphi 0, %s23
    %s43 = sphi 0, %s43
    %s45 = sphi 0, %s43
    %s46 = sphi 0, %s45
    %s60 = sphi 0, %s46
    %s64 = sphi 0, %s64
    %s66 = sphi 0, %s64
    %s67 = sphi 0, %s66
    %s81 = sphi 0, %s67
    %s87 = sphi 0, %s89
    %s90 = sphi 0, %s87
    %s91 = sphi 0, %s90
    %s107 = sphi 0, %s91
  $region4: #{get_abstract_caps_up.1} parent=0 // loop_header_branch
    %12 = sbr.rel (%p10) target = $region8
  $region5: #{get_abstract_caps_up.1} parent=0 // loop_body
    %s14 = ssub.s32 %s9, 1
    %s15 = ssub.s32 %s9, 2
    %s16 = sadd.s32 %s9, 1
    %s17 = ssub.s32 %s9, %s16
    %p18 = scmp.eq.s32.totalorder %s17, 0
    %s20 = sadd.s32 %s19, 1
    %s21 = scalar_select %p18, %s19, %s20
    %p24 = pneg %p18
    %p25 = scmp.eq.s32.totalorder %s9, 1
    %p26 = por %p24, %p25
    %p27 = scmp.ne.s32.totalorder %s19, %s22
    %p28 = scmp.eq.s32.totalorder %s9, 0
    %p29 = por %p27, %p28
    %p30 = scmp.ne.s32.totalorder %s19, %s22
    %p31 = scmp.eq.s32.totalorder %s14, 1
    %p32 = por %p30, %p31
    %p33 = scmp.ne.s32.totalorder %s22, %s23
    %p34 = scmp.eq.s32.totalorder %s14, 0
    %p35 = por %p33, %p34
    %p36 = scmp.ne.s32.totalorder %s22, %s23
    %p37 = scmp.eq.s32.totalorder %s15, 1
    %p38 = por %p36, %p37
    %p40 = scmp.ne.s32.totalorder %s23, %s39
    %p41 = scmp.eq.s32.totalorder %s15, 0
    %p42 = por %p40, %p41
    %s44 = sadd.s32 %s43, 1
    %p47 = scmp.eq.s32.totalorder %s9, 1
    %p48 = scmp.ne.s32.totalorder %s43, %s45
    %p49 = scmp.eq.s32.totalorder %s9, 0
    %p50 = por %p48, %p49
    %p51 = scmp.ne.s32.totalorder %s43, %s45
    %p52 = scmp.eq.s32.totalorder %s14, 1
    %p53 = por %p51, %p52
    %p54 = scmp.ne.s32.totalorder %s45, %s46
    %p55 = scmp.eq.s32.totalorder %s14, 0
    %p56 = por %p54, %p55
    %p57 = scmp.ne.s32.totalorder %s45, %s46
    %p58 = scmp.eq.s32.totalorder %s15, 1
    %p59 = por %p57, %p58
    %p61 = scmp.ne.s32.totalorder %s46, %s60
    %p62 = scmp.eq.s32.totalorder %s15, 0
    %p63 = por %p61, %p62
    %s65 = sadd.s32 %s64, 1
    %p68 = scmp.eq.s32.totalorder %s9, 1
    %p69 = scmp.ne.s32.totalorder %s64, %s66
    %p70 = scmp.eq.s32.totalorder %s9, 0
    %p71 = por %p69, %p70
    %p72 = scmp.ne.s32.totalorder %s64, %s66
    %p73 = scmp.eq.s32.totalorder %s14, 1
    %p74 = por %p72, %p73
    %p75 = scmp.ne.s32.totalorder %s66, %s67
    %p76 = scmp.eq.s32.totalorder %s14, 0
    %p77 = por %p75, %p76
    %p78 = scmp.ne.s32.totalorder %s66, %s67
    %p79 = scmp.eq.s32.totalorder %s15, 1
    %p80 = por %p78, %p79
    %p82 = scmp.ne.s32.totalorder %s67, %s81
    %p83 = scmp.eq.s32.totalorder %s15, 0
    %p84 = por %p82, %p83
    %s85 = ssub.s32 %s9, %s16
    %p86 = scmp.eq.s32.totalorder %s85, 0
    %s88 = sadd.s32 %s87, 1
    %s89 = scalar_select %p86, %s87, %s88
    %p92 = pneg %p86
    %p93 = scmp.eq.s32.totalorder %s9, 1
    %p94 = por %p92, %p93
    %p95 = scmp.ne.s32.totalorder %s87, %s90
    %p96 = scmp.eq.s32.totalorder %s9, 0
    %p97 = por %p95, %p96
    %p98 = scmp.ne.s32.totalorder %s87, %s90
    %p99 = scmp.eq.s32.totalorder %s14, 1
    %p100 = por %p98, %p99
    %p101 = scmp.ne.s32.totalorder %s90, %s91
    %p102 = scmp.eq.s32.totalorder %s14, 0
    %p103 = por %p101, %p102
    %p104 = scmp.ne.s32.totalorder %s90, %s91
    %p105 = scmp.eq.s32.totalorder %s15, 1
    %p106 = por %p104, %p105
    %p108 = scmp.ne.s32.totalorder %s91, %s107
    %p109 = scmp.eq.s32.totalorder %s15, 0
    %p110 = por %p108, %p109
    %p111 = scmp.le.s32.totalorder 1, %s9
    %p112 = scmp.lt.s32.totalorder %s9, 3
    %p113 = pnand %p111, %p112
    %p114 = pneg %p113
    // Predicated region
    $region9: #{get_abstract_caps_up.1} parent=5 // pred_check
      _
    $region10: #{get_abstract_caps_up.1} parent=5 // pred_check_branch
      %116 = sbr.rel (%p113) target = $region12
    $region11: #{get_abstract_caps_up.1} parent=5 // pred_region
      %s117 = ssub.s32 %s9, 1
      // Predicated region
      $region13: #{get_abstract_caps_up.1} parent=11 // pred_check
        %p118 = pneg %p56
      $region14: #{get_abstract_caps_up.1} parent=11 // pred_check_branch
        %120 = sbr.rel (%p118) target = $region16
      $region15: #{get_abstract_caps_up.1} parent=11 // pred_region
        _
      $region16: #{get_abstract_caps_up.1} parent=11 // pred_fallthru
        _
      // Predicated region
      $region17: #{get_abstract_caps_up.1} parent=11 // pred_check
        %p121 = pneg %p77
      $region18: #{get_abstract_caps_up.1} parent=11 // pred_check_branch
        %123 = sbr.rel (%p121) target = $region20
      $region19: #{get_abstract_caps_up.1} parent=11 // pred_region
        _
      $region20: #{get_abstract_caps_up.1} parent=11 // pred_fallthru
        _
    $region12: #{get_abstract_caps_up.1} parent=5 // pred_fallthru
      _
    %p124 = scmp.lt.s32.totalorder %s9, 2
    // Predicated region
    $region21: #{get_abstract_caps_up.1} parent=5 // pred_check
      %p125 = pneg %p124
    $region22: #{get_abstract_caps_up.1} parent=5 // pred_check_branch
      %127 = sbr.rel (%p125) target = $region24
    $region23: #{get_abstract_caps_up.1} parent=5 // pred_region
      // Predicated region
      $region25: #{get_abstract_caps_up.1} parent=23 // pred_check
        %p128 = pneg %p29
      $region26: #{get_abstract_caps_up.1} parent=23 // pred_check_branch
        %130 = sbr.rel (%p128) target = $region28
      $region27: #{get_abstract_caps_up.1} parent=23 // pred_region
        %p131 = scmp.lt.s32.totalorder %s9, 1
        %s132 = scalar_select %p131, %s9, 1
        %s133 = smul.addr %s132, 8
        %s134 = smul.addr %s133, 8
        %s135 = scalar_lea.vmem %s0, %s134
      $region28: #{get_abstract_caps_up.1} parent=23 // pred_fallthru
        _
    $region24: #{get_abstract_caps_up.1} parent=5 // pred_fallthru
      _
    %p136 = scmp.le.s32.totalorder 1, %s9
    %p137 = scmp.lt.s32.totalorder %s9, 3
    %p138 = pnand %p136, %p137
    %p139 = pneg %p138
    // Predicated region
    $region29: #{get_abstract_caps_up.1} parent=5 // pred_check
      _
    $region30: #{get_abstract_caps_up.1} parent=5 // pred_check_branch
      %141 = sbr.rel (%p138) target = $region32
    $region31: #{get_abstract_caps_up.1} parent=5 // pred_region
      %s142 = ssub.s32 %s9, 1
      %p143 = scmp.lt.s32.totalorder %s14, 1
      %s144 = scalar_select %p143, %s14, 1
      %s145 = smul.addr %s144, 8
      %s146 = smul.addr %s145, 8
      %s147 = scalar_lea.vmem %s0, %s146
      %p148 = pneg %p35
      %p149 = pneg %p32
      %p150 = pneg %p56
      %p151 = pneg %p53
      %p152 = pneg %p77
      %p153 = pneg %p74
      %p154 = pneg %p103
      %p155 = pneg %p100
      %p156 = scmp.lt.s32.totalorder %s14, 1
      %s157 = scalar_select %p156, %s14, 1
      %s158 = smul.addr %s157, 8
      %s159 = smul.addr %s158, 8
      %s160 = scalar_lea.vmem %s3, %s159
      %p161 = scmp.lt.s32.totalorder %s14, 1
      %s162 = scalar_select %p161, %s14, 1
      %s163 = smul.addr %s162, 8
      %s164 = smul.addr %s163, 8
      %s165 = scalar_lea.vmem %s0, %s164
      %p166 = scmp.lt.s32.totalorder %s14, 1
      %s167 = scalar_select %p166, %s14, 1
      %s168 = smul.addr %s167, 8
      %s169 = smul.addr %s168, 8
      %s170 = scalar_lea.vmem %s3, %s169
      %v171 = vld [vmem:[%s165] sm:$0xff]
      %v172 = vld [vmem:[%s165 + $0x8] sm:$0xff]
      %v173 = vld [vmem:[%s165 + $0x10] sm:$0xff]
      %v174 = vld [vmem:[%s165 + $0x18] sm:$0xff]
      %v175 = vld [vmem:[%s165 + $0x20] sm:$0xff]
      %v176 = vld [vmem:[%s165 + $0x28] sm:$0xff]
      %v177 = vld [vmem:[%s165 + $0x30] sm:$0xff]
      %v178 = vld [vmem:[%s165 + $0x38] sm:$0xff]
      %v179 = vld [vmem:[%s1] sm:$0xff]
      %v180 = vld [vmem:[%s1 + $0x8] sm:$0xff]
      %v181 = vld [vmem:[%s1 + $0x10] sm:$0xff]
      %v182 = vld [vmem:[%s1 + $0x18] sm:$0xff]
      %v183 = vld [vmem:[%s2] sm:$0x1]
      %v185 = vlaneseq
      %v186 = vshrl.u32 %v185, 7
      %v187 = vsub.s32 0, %v186
      %v188 = vrot.slane %v183, %v187
      %vm190 = vcmask 261120
      %v192 = vsel %vm190, %v171, 0
      %v195 = vsel %vm190, %v172, 0
      %v198 = vsel %vm190, %v173, 0
      %v201 = vsel %vm190, %v174, 0
      %v204 = vsel %vm190, %v175, 0
      %v207 = vsel %vm190, %v176, 0
      %v210 = vsel %vm190, %v177, 0
      %v213 = vsel %vm190, %v178, 0
      %215 = vmatprep.subr.mxu0 0.0
      %216 = vmatpush1.msra.mxu0 %v179
      %217 = vmatprep.subr.mxu0 0.0
      %218 = vmatpush1.msra.mxu0 %v180
      %219 = vmatprep.subr.mxu0 0.0
      %220 = vmatpush1.msra.mxu0 %v181
      %221 = vmatprep.subr.mxu0 0.0
      %222 = vmatpush1.msra.mxu0 %v182
      %223 = vmatprep.subr.mxu0 0.0
      %224 = vmatpush1.msra.mxu0 0.0
      %225 = vmatprep.subr.mxu0 0.0
      %226 = vmatpush1.msra.mxu0 0.0
      %227 = vmatprep.subr.mxu0 0.0
      %228 = vmatpush1.msra.mxu0 0.0
      %229 = vmatprep.subr.mxu0 0.0
      %230 = vmatpush1.msra.mxu0 0.0
      %231 = vmatprep.subr.mxu0 0.0
      %232 = vmatpush1.msra.mxu0 0.0
      %233 = vmatprep.subr.mxu0 0.0
      %234 = vmatpush1.msra.mxu0 0.0
      %235 = vmatprep.subr.mxu0 0.0
      %236 = vmatpush1.msra.mxu0 0.0
      %237 = vmatprep.subr.mxu0 0.0
      %238 = vmatpush1.msra.mxu0 0.0
      %239 = vmatprep.subr.mxu0 0.0
      %240 = vmatpush1.msra.mxu0 0.0
      %241 = vmatprep.subr.mxu0 0.0
      %242 = vmatpush1.msra.mxu0 0.0
      %243 = vmatprep.subr.mxu0 0.0
      %244 = vmatpush1.msra.mxu0 0.0
      %245 = vmatprep.subr.mxu0 0.0
      %246 = vmatpush1.msra.mxu0 0.0
      %247 = vmatprep.subr.mxu0 0.0
      %248 = vmatpush1.msra.mxu0 0.0
      %249 = vmatprep.subr.mxu0 0.0
      %250 = vmatpush1.msra.mxu0 0.0
      %251 = vmatprep.subr.mxu0 0.0
      %252 = vmatpush1.msra.mxu0 0.0
      %253 = vmatprep.subr.mxu0 0.0
      %254 = vmatpush1.msra.mxu0 0.0
      %255 = vmatprep.subr.mxu0 0.0
      %256 = vmatpush1.msra.mxu0 0.0
      %257 = vmatprep.subr.mxu0 0.0
      %258 = vmatpush1.msra.mxu0 0.0
      %259 = vmatprep.subr.mxu0 0.0
      %260 = vmatpush1.msra.mxu0 0.0
      %261 = vmatprep.subr.mxu0 0.0
      %262 = vmatpush1.msra.mxu0 0.0
      %263 = vmatprep.subr.mxu0 0.0
      %264 = vmatpush1.msra.mxu0 0.0
      %265 = vmatprep.subr.mxu0 0.0
      %266 = vmatpush1.msra.mxu0 0.0
      %267 = vmatprep.subr.mxu0 0.0
      %268 = vmatpush1.msra.mxu0 0.0
      %269 = vmatprep.subr.mxu0 0.0
      %270 = vmatpush1.msra.mxu0 0.0
      %271 = vmatprep.subr.mxu0 0.0
      %272 = vmatpush1.msra.mxu0 0.0
      %273 = vmatprep.subr.mxu0 0.0
      %274 = vmatpush1.msra.mxu0 0.0
      %275 = vmatprep.subr.mxu0 0.0
      %276 = vmatpush1.msra.mxu0 0.0
      %277 = vmatprep.subr.mxu0 0.0
      %278 = vmatpush1.msra.mxu0 0.0
      %279 = vmatprep.mubr.f32.mxu0 0.0
      %280 = vmatmul.mubr.f32.gmra.mrb[0].mxu0 %v192
      %v281 = vpop.f32.mrb[0].mxu0
      %v282 = vadd.f32 %v188, %v281
      %v283 = vpop.f32.mrb[0].mxu0
      %284 = vmatprep.mubr.f32.mxu0 0.0
      %285 = vmatmul.mubr.f32.gmra.mrb[0].mxu0 %v195
      %v286 = vpop.f32.mrb[0].mxu0
      %v287 = vadd.f32 %v188, %v286
      %v288 = vpop.f32.mrb[0].mxu0
      %289 = vmatprep.mubr.f32.mxu0 0.0
      %290 = vmatmul.mubr.f32.gmra.mrb[0].mxu0 %v198
      %v291 = vpop.f32.mrb[0].mxu0
      %v292 = vadd.f32 %v188, %v291
      %v293 = vpop.f32.mrb[0].mxu0
      %294 = vmatprep.mubr.f32.mxu0 0.0
      %295 = vmatmul.mubr.f32.gmra.mrb[0].mxu0 %v201
      %v296 = vpop.f32.mrb[0].mxu0
      %v297 = vadd.f32 %v188, %v296
      %v298 = vpop.f32.mrb[0].mxu0
      %299 = vmatprep.mubr.f32.mxu0 0.0
      %300 = vmatmul.mubr.f32.gmra.mrb[0].mxu0 %v204
      %v301 = vpop.f32.mrb[0].mxu0
      %v302 = vadd.f32 %v188, %v301
      %v303 = vpop.f32.mrb[0].mxu0
      %304 = vmatprep.mubr.f32.mxu0 0.0
      %305 = vmatmul.mubr.f32.gmra.mrb[0].mxu0 %v207
      %v306 = vpop.f32.mrb[0].mxu0
      %v307 = vadd.f32 %v188, %v306
      %v308 = vpop.f32.mrb[0].mxu0
      %309 = vmatprep.mubr.f32.mxu0 0.0
      %310 = vmatmul.mubr.f32.gmra.mrb[0].mxu0 %v210
      %v311 = vpop.f32.mrb[0].mxu0
      %v312 = vadd.f32 %v188, %v311
      %v313 = vpop.f32.mrb[0].mxu0
      %314 = vmatprep.mubr.f32.mxu0 0.0
      %315 = vmatmul.mubr.f32.gmra.mrb[0].mxu0 %v213
      %v316 = vpop.f32.mrb[0].mxu0
      %v317 = vadd.f32 %v188, %v316
      %v318 = vpop.f32.mrb[0].mxu0
      %319 = vdwg.mxu0
      %v320 = vmul.f32 %v282, %v282
      %v321 = vmul.f32 %v287, %v287
      %v322 = vmul.f32 %v292, %v292
      %v323 = vmul.f32 %v297, %v297
      %v324 = vmul.f32 %v302, %v302
      %v325 = vmul.f32 %v307, %v307
      %v326 = vmul.f32 %v312, %v312
      %v327 = vmul.f32 %v317, %v317
      %vm328 = vcmask 130048
      %v329 = vsel %vm328, %v320, 0.0
      %330 = vadd.xlane.f32.xlu0 %v329
      %v331 = vpop.xlane.xlu0 %330
      %v332 = vsel %vm328, %v321, 0.0
      %333 = vadd.xlane.f32.xlu0 %v332
      %v334 = vpop.xlane.xlu0 %333
      %v335 = vsel %vm328, %v322, 0.0
      %336 = vadd.xlane.f32.xlu0 %v335
      %v337 = vpop.xlane.xlu0 %336
      %v338 = vsel %vm328, %v323, 0.0
      %339 = vadd.xlane.f32.xlu0 %v338
      %v340 = vpop.xlane.xlu0 %339
      %v341 = vsel %vm328, %v324, 0.0
      %342 = vadd.xlane.f32.xlu0 %v341
      %v343 = vpop.xlane.xlu0 %342
      %v344 = vsel %vm328, %v325, 0.0
      %345 = vadd.xlane.f32.xlu0 %v344
      %v346 = vpop.xlane.xlu0 %345
      %v347 = vsel %vm328, %v326, 0.0
      %348 = vadd.xlane.f32.xlu0 %v347
      %v349 = vpop.xlane.xlu0 %348
      %v350 = vsel %vm328, %v327, 0.0
      %351 = vadd.xlane.f32.xlu0 %v350
      %v352 = vpop.xlane.xlu0 %351
      %v353 = vadd.f32 %v331, 1.0
      %v354 = vadd.f32 %v334, 1.0
      %v355 = vadd.f32 %v337, 1.0
      %v356 = vadd.f32 %v340, 1.0
      %v357 = vadd.f32 %v343, 1.0
      %v358 = vadd.f32 %v346, 1.0
      %v359 = vadd.f32 %v349, 1.0
      %v360 = vadd.f32 %v352, 1.0
      %v361 = vadd.f32 %v331, 1e-07
      %v362 = vadd.f32 %v334, 1e-07
      %v363 = vadd.f32 %v337, 1e-07
      %v364 = vadd.f32 %v340, 1e-07
      %v365 = vadd.f32 %v343, 1e-07
      %v366 = vadd.f32 %v346, 1e-07
      %v367 = vadd.f32 %v349, 1e-07
      %v368 = vadd.f32 %v352, 1e-07
      %v369 = vrsqrt.pop %v361
      %v370 = vmul.f32 %v361, %v369
      %vm371 = vcmp.eq.f32.partialorder %v361, inf
      %v372 = vsel %vm371, %v361, %v370
      %vm373 = vcmp.eq.f32.partialorder %v361, 0.0
      %v374 = vand.u32 %v361, 2147483648
      %v375 = vsel %vm373, %v374, %v372
      %v376 = vrsqrt.pop %v362
      %v377 = vmul.f32 %v362, %v376
      %vm378 = vcmp.eq.f32.partialorder %v362, inf
      %v379 = vsel %vm378, %v362, %v377
      %vm380 = vcmp.eq.f32.partialorder %v362, 0.0
      %v381 = vand.u32 %v362, 2147483648
      %v382 = vsel %vm380, %v381, %v379
      %v383 = vrsqrt.pop %v363
      %v384 = vmul.f32 %v363, %v383
      %vm385 = vcmp.eq.f32.partialorder %v363, inf
      %v386 = vsel %vm385, %v363, %v384
      %vm387 = vcmp.eq.f32.partialorder %v363, 0.0
      %v388 = vand.u32 %v363, 2147483648
      %v389 = vsel %vm387, %v388, %v386
      %v390 = vrsqrt.pop %v364
      %v391 = vmul.f32 %v364, %v390
      %vm392 = vcmp.eq.f32.partialorder %v364, inf
      %v393 = vsel %vm392, %v364, %v391
      %vm394 = vcmp.eq.f32.partialorder %v364, 0.0
      %v395 = vand.u32 %v364, 2147483648
      %v396 = vsel %vm394, %v395, %v393
      %v397 = vrsqrt.pop %v365
      %v398 = vmul.f32 %v365, %v397
      %vm399 = vcmp.eq.f32.partialorder %v365, inf
      %v400 = vsel %vm399, %v365, %v398
      %vm401 = vcmp.eq.f32.partialorder %v365, 0.0
      %v402 = vand.u32 %v365, 2147483648
      %v403 = vsel %vm401, %v402, %v400
      %v404 = vrsqrt.pop %v366
      %v405 = vmul.f32 %v366, %v404
      %vm406 = vcmp.eq.f32.partialorder %v366, inf
      %v407 = vsel %vm406, %v366, %v405
      %vm408 = vcmp.eq.f32.partialorder %v366, 0.0
      %v409 = vand.u32 %v366, 2147483648
      %v410 = vsel %vm408, %v409, %v407
      %v411 = vrsqrt.pop %v367
      %v412 = vmul.f32 %v367, %v411
      %vm413 = vcmp.eq.f32.partialorder %v367, inf
      %v414 = vsel %vm413, %v367, %v412
      %vm415 = vcmp.eq.f32.partialorder %v367, 0.0
      %v416 = vand.u32 %v367, 2147483648
      %v417 = vsel %vm415, %v416, %v414
      %v418 = vrsqrt.pop %v368
      %v419 = vmul.f32 %v368, %v418
      %vm420 = vcmp.eq.f32.partialorder %v368, inf
      %v421 = vsel %vm420, %v368, %v419
      %vm422 = vcmp.eq.f32.partialorder %v368, 0.0
      %v423 = vand.u32 %v368, 2147483648
      %v424 = vsel %vm422, %v423, %v421
      %v425 = vmul.f32 %v353, %v375
      %v426 = vmul.f32 %v354, %v382
      %v427 = vmul.f32 %v355, %v389
      %v428 = vmul.f32 %v356, %v396
      %v429 = vmul.f32 %v357, %v403
      %v430 = vmul.f32 %v358, %v410
      %v431 = vmul.f32 %v359, %v417
      %v432 = vmul.f32 %v360, %v424
      %v433 = vrcp.pop %v425
      %v434 = vmul.f32 %v331, %v433
      %v435 = vrcp.pop %v426
      %v436 = vmul.f32 %v334, %v435
      %v437 = vrcp.pop %v427
      %v438 = vmul.f32 %v337, %v437
      %v439 = vrcp.pop %v428
      %v440 = vmul.f32 %v340, %v439
      %v441 = vrcp.pop %v429
      %v442 = vmul.f32 %v343, %v441
      %v443 = vrcp.pop %v430
      %v444 = vmul.f32 %v346, %v443
      %v445 = vrcp.pop %v431
      %v446 = vmul.f32 %v349, %v445
      %v447 = vrcp.pop %v432
      %v448 = vmul.f32 %v352, %v447
      %v449 = vmul.f32 %v282, %v434
      %v450 = vmul.f32 %v287, %v436
      %v451 = vmul.f32 %v292, %v438
      %v452 = vmul.f32 %v297, %v440
      %v453 = vmul.f32 %v302, %v442
      %v454 = vmul.f32 %v307, %v444
      %v455 = vmul.f32 %v312, %v446
      %v456 = vmul.f32 %v317, %v448
      %465 = vrot.lane.b32.xlu0 %v320, 112
      %v466 = vpop.permute.xlu0 %465
      %467 = vrot.lane.b32.xlu0 %v321, 112
      %v468 = vpop.permute.xlu0 %467
      %469 = vrot.lane.b32.xlu0 %v322, 112
      %v470 = vpop.permute.xlu0 %469
      %471 = vrot.lane.b32.xlu0 %v323, 112
      %v472 = vpop.permute.xlu0 %471
      %473 = vrot.lane.b32.xlu0 %v324, 112
      %v474 = vpop.permute.xlu0 %473
      %475 = vrot.lane.b32.xlu0 %v325, 112
      %v476 = vpop.permute.xlu0 %475
      %477 = vrot.lane.b32.xlu0 %v326, 112
      %v478 = vpop.permute.xlu0 %477
      %479 = vrot.lane.b32.xlu0 %v327, 112
      %v480 = vpop.permute.xlu0 %479
      %v489 = vsel %vm328, %v466, 0.0
      %490 = vadd.xlane.f32.xlu0 %v489
      %v491 = vpop.xlane.xlu0 %490
      %v492 = vsel %vm328, %v468, 0.0
      %493 = vadd.xlane.f32.xlu0 %v492
      %v494 = vpop.xlane.xlu0 %493
      %v495 = vsel %vm328, %v470, 0.0
      %496 = vadd.xlane.f32.xlu0 %v495
      %v497 = vpop.xlane.xlu0 %496
      %v498 = vsel %vm328, %v472, 0.0
      %499 = vadd.xlane.f32.xlu0 %v498
      %v500 = vpop.xlane.xlu0 %499
      %v501 = vsel %vm328, %v474, 0.0
      %502 = vadd.xlane.f32.xlu0 %v501
      %v503 = vpop.xlane.xlu0 %502
      %v504 = vsel %vm328, %v476, 0.0
      %505 = vadd.xlane.f32.xlu0 %v504
      %v506 = vpop.xlane.xlu0 %505
      %v507 = vsel %vm328, %v478, 0.0
      %508 = vadd.xlane.f32.xlu0 %v507
      %v509 = vpop.xlane.xlu0 %508
      %v510 = vsel %vm328, %v480, 0.0
      %511 = vadd.xlane.f32.xlu0 %v510
      %v512 = vpop.xlane.xlu0 %511
      %v513 = vadd.f32 %v491, 1.0
      %v514 = vadd.f32 %v494, 1.0
      %v515 = vadd.f32 %v497, 1.0
      %v516 = vadd.f32 %v500, 1.0
      %v517 = vadd.f32 %v503, 1.0
      %v518 = vadd.f32 %v506, 1.0
      %v519 = vadd.f32 %v509, 1.0
      %v520 = vadd.f32 %v512, 1.0
      %v521 = vadd.f32 %v491, 1e-07
      %v522 = vadd.f32 %v494, 1e-07
      %v523 = vadd.f32 %v497, 1e-07
      %v524 = vadd.f32 %v500, 1e-07
      %v525 = vadd.f32 %v503, 1e-07
      %v526 = vadd.f32 %v506, 1e-07
      %v527 = vadd.f32 %v509, 1e-07
      %v528 = vadd.f32 %v512, 1e-07
      %v529 = vrsqrt.pop %v521
      %v530 = vmul.f32 %v521, %v529
      %vm531 = vcmp.eq.f32.partialorder %v521, inf
      %v532 = vsel %vm531, %v521, %v530
      %vm533 = vcmp.eq.f32.partialorder %v521, 0.0
      %v534 = vand.u32 %v521, 2147483648
      %v535 = vsel %vm533, %v534, %v532
      %v536 = vrsqrt.pop %v522
      %v537 = vmul.f32 %v522, %v536
      %vm538 = vcmp.eq.f32.partialorder %v522, inf
      %v539 = vsel %vm538, %v522, %v537
      %vm540 = vcmp.eq.f32.partialorder %v522, 0.0
      %v541 = vand.u32 %v522, 2147483648
      %v542 = vsel %vm540, %v541, %v539
      %v543 = vrsqrt.pop %v523
      %v544 = vmul.f32 %v523, %v543
      %vm545 = vcmp.eq.f32.partialorder %v523, inf
      %v546 = vsel %vm545, %v523, %v544
      %vm547 = vcmp.eq.f32.partialorder %v523, 0.0
      %v548 = vand.u32 %v523, 2147483648
      %v549 = vsel %vm547, %v548, %v546
      %v550 = vrsqrt.pop %v524
      %v551 = vmul.f32 %v524, %v550
      %vm552 = vcmp.eq.f32.partialorder %v524, inf
      %v553 = vsel %vm552, %v524, %v551
      %vm554 = vcmp.eq.f32.partialorder %v524, 0.0
      %v555 = vand.u32 %v524, 2147483648
      %v556 = vsel %vm554, %v555, %v553
      %v557 = vrsqrt.pop %v525
      %v558 = vmul.f32 %v525, %v557
      %vm559 = vcmp.eq.f32.partialorder %v525, inf
      %v560 = vsel %vm559, %v525, %v558
      %vm561 = vcmp.eq.f32.partialorder %v525, 0.0
      %v562 = vand.u32 %v525, 2147483648
      %v563 = vsel %vm561, %v562, %v560
      %v564 = vrsqrt.pop %v526
      %v565 = vmul.f32 %v526, %v564
      %vm566 = vcmp.eq.f32.partialorder %v526, inf
      %v567 = vsel %vm566, %v526, %v565
      %vm568 = vcmp.eq.f32.partialorder %v526, 0.0
      %v569 = vand.u32 %v526, 2147483648
      %v570 = vsel %vm568, %v569, %v567
      %v571 = vrsqrt.pop %v527
      %v572 = vmul.f32 %v527, %v571
      %vm573 = vcmp.eq.f32.partialorder %v527, inf
      %v574 = vsel %vm573, %v527, %v572
      %vm575 = vcmp.eq.f32.partialorder %v527, 0.0
      %v576 = vand.u32 %v527, 2147483648
      %v577 = vsel %vm575, %v576, %v574
      %v578 = vrsqrt.pop %v528
      %v579 = vmul.f32 %v528, %v578
      %vm580 = vcmp.eq.f32.partialorder %v528, inf
      %v581 = vsel %vm580, %v528, %v579
      %vm582 = vcmp.eq.f32.partialorder %v528, 0.0
      %v583 = vand.u32 %v528, 2147483648
      %v584 = vsel %vm582, %v583, %v581
      %v585 = vmul.f32 %v513, %v535
      %v586 = vmul.f32 %v514, %v542
      %v587 = vmul.f32 %v515, %v549
      %v588 = vmul.f32 %v516, %v556
      %v589 = vmul.f32 %v517, %v563
      %v590 = vmul.f32 %v518, %v570
      %v591 = vmul.f32 %v519, %v577
      %v592 = vmul.f32 %v520, %v584
      %v593 = vrcp.pop %v585
      %v594 = vmul.f32 %v491, %v593
      %v595 = vrcp.pop %v586
      %v596 = vmul.f32 %v494, %v595
      %v597 = vrcp.pop %v587
      %v598 = vmul.f32 %v497, %v597
      %v599 = vrcp.pop %v588
      %v600 = vmul.f32 %v500, %v599
      %v601 = vrcp.pop %v589
      %v602 = vmul.f32 %v503, %v601
      %v603 = vrcp.pop %v590
      %v604 = vmul.f32 %v506, %v603
      %v605 = vrcp.pop %v591
      %v606 = vmul.f32 %v509, %v605
      %v607 = vrcp.pop %v592
      %v608 = vmul.f32 %v512, %v607
      %v609 = vmul.f32 %v282, %v594
      %v610 = vmul.f32 %v287, %v596
      %v611 = vmul.f32 %v292, %v598
      %v612 = vmul.f32 %v297, %v600
      %v613 = vmul.f32 %v302, %v602
      %v614 = vmul.f32 %v307, %v604
      %v615 = vmul.f32 %v312, %v606
      %v616 = vmul.f32 %v317, %v608
      %617 = vrot.lane.b32.xlu0 %v320, 96
      %v618 = vpop.permute.xlu0 %617
      %619 = vrot.lane.b32.xlu0 %v321, 96
      %v620 = vpop.permute.xlu0 %619
      %621 = vrot.lane.b32.xlu0 %v322, 96
      %v622 = vpop.permute.xlu0 %621
      %623 = vrot.lane.b32.xlu0 %v323, 96
      %v624 = vpop.permute.xlu0 %623
      %625 = vrot.lane.b32.xlu0 %v324, 96
      %v626 = vpop.permute.xlu0 %625
      %627 = vrot.lane.b32.xlu0 %v325, 96
      %v628 = vpop.permute.xlu0 %627
      %629 = vrot.lane.b32.xlu0 %v326, 96
      %v630 = vpop.permute.xlu0 %629
      %631 = vrot.lane.b32.xlu0 %v327, 96
      %v632 = vpop.permute.xlu0 %631
      %v641 = vsel %vm328, %v618, 0.0
      %642 = vadd.xlane.f32.xlu0 %v641
      %v643 = vpop.xlane.xlu0 %642
      %v644 = vsel %vm328, %v620, 0.0
      %645 = vadd.xlane.f32.xlu0 %v644
      %v646 = vpop.xlane.xlu0 %645
      %v647 = vsel %vm328, %v622, 0.0
      %648 = vadd.xlane.f32.xlu0 %v647
      %v649 = vpop.xlane.xlu0 %648
      %v650 = vsel %vm328, %v624, 0.0
      %651 = vadd.xlane.f32.xlu0 %v650
      %v652 = vpop.xlane.xlu0 %651
      %v653 = vsel %vm328, %v626, 0.0
      %654 = vadd.xlane.f32.xlu0 %v653
      %v655 = vpop.xlane.xlu0 %654
      %v656 = vsel %vm328, %v628, 0.0
      %657 = vadd.xlane.f32.xlu0 %v656
      %v658 = vpop.xlane.xlu0 %657
      %v659 = vsel %vm328, %v630, 0.0
      %660 = vadd.xlane.f32.xlu0 %v659
      %v661 = vpop.xlane.xlu0 %660
      %v662 = vsel %vm328, %v632, 0.0
      %663 = vadd.xlane.f32.xlu0 %v662
      %v664 = vpop.xlane.xlu0 %663
      %v665 = vadd.f32 %v643, 1.0
      %v666 = vadd.f32 %v646, 1.0
      %v667 = vadd.f32 %v649, 1.0
      %v668 = vadd.f32 %v652, 1.0
      %v669 = vadd.f32 %v655, 1.0
      %v670 = vadd.f32 %v658, 1.0
      %v671 = vadd.f32 %v661, 1.0
      %v672 = vadd.f32 %v664, 1.0
      %v673 = vadd.f32 %v643, 1e-07
      %v674 = vadd.f32 %v646, 1e-07
      %v675 = vadd.f32 %v649, 1e-07
      %v676 = vadd.f32 %v652, 1e-07
      %v677 = vadd.f32 %v655, 1e-07
      %v678 = vadd.f32 %v658, 1e-07
      %v679 = vadd.f32 %v661, 1e-07
      %v680 = vadd.f32 %v664, 1e-07
      %v681 = vrsqrt.pop %v673
      %v682 = vmul.f32 %v673, %v681
      %vm683 = vcmp.eq.f32.partialorder %v673, inf
      %v684 = vsel %vm683, %v673, %v682
      %vm685 = vcmp.eq.f32.partialorder %v673, 0.0
      %v686 = vand.u32 %v673, 2147483648
      %v687 = vsel %vm685, %v686, %v684
      %v688 = vrsqrt.pop %v674
      %v689 = vmul.f32 %v674, %v688
      %vm690 = vcmp.eq.f32.partialorder %v674, inf
      %v691 = vsel %vm690, %v674, %v689
      %vm692 = vcmp.eq.f32.partialorder %v674, 0.0
      %v693 = vand.u32 %v674, 2147483648
      %v694 = vsel %vm692, %v693, %v691
      %v695 = vrsqrt.pop %v675
      %v696 = vmul.f32 %v675, %v695
      %vm697 = vcmp.eq.f32.partialorder %v675, inf
      %v698 = vsel %vm697, %v675, %v696
      %vm699 = vcmp.eq.f32.partialorder %v675, 0.0
      %v700 = vand.u32 %v675, 2147483648
      %v701 = vsel %vm699, %v700, %v698
      %v702 = vrsqrt.pop %v676
      %v703 = vmul.f32 %v676, %v702
      %vm704 = vcmp.eq.f32.partialorder %v676, inf
      %v705 = vsel %vm704, %v676, %v703
      %vm706 = vcmp.eq.f32.partialorder %v676, 0.0
      %v707 = vand.u32 %v676, 2147483648
      %v708 = vsel %vm706, %v707, %v705
      %v709 = vrsqrt.pop %v677
      %v710 = vmul.f32 %v677, %v709
      %vm711 = vcmp.eq.f32.partialorder %v677, inf
      %v712 = vsel %vm711, %v677, %v710
      %vm713 = vcmp.eq.f32.partialorder %v677, 0.0
      %v714 = vand.u32 %v677, 2147483648
      %v715 = vsel %vm713, %v714, %v712
      %v716 = vrsqrt.pop %v678
      %v717 = vmul.f32 %v678, %v716
      %vm718 = vcmp.eq.f32.partialorder %v678, inf
      %v719 = vsel %vm718, %v678, %v717
      %vm720 = vcmp.eq.f32.partialorder %v678, 0.0
      %v721 = vand.u32 %v678, 2147483648
      %v722 = vsel %vm720, %v721, %v719
      %v723 = vrsqrt.pop %v679
      %v724 = vmul.f32 %v679, %v723
      %vm725 = vcmp.eq.f32.partialorder %v679, inf
      %v726 = vsel %vm725, %v679, %v724
      %vm727 = vcmp.eq.f32.partialorder %v679, 0.0
      %v728 = vand.u32 %v679, 2147483648
      %v729 = vsel %vm727, %v728, %v726
      %v730 = vrsqrt.pop %v680
      %v731 = vmul.f32 %v680, %v730
      %vm732 = vcmp.eq.f32.partialorder %v680, inf
      %v733 = vsel %vm732, %v680, %v731
      %vm734 = vcmp.eq.f32.partialorder %v680, 0.0
      %v735 = vand.u32 %v680, 2147483648
      %v736 = vsel %vm734, %v735, %v733
      %v737 = vmul.f32 %v665, %v687
      %v738 = vmul.f32 %v666, %v694
      %v739 = vmul.f32 %v667, %v701
      %v740 = vmul.f32 %v668, %v708
      %v741 = vmul.f32 %v669, %v715
      %v742 = vmul.f32 %v670, %v722
      %v743 = vmul.f32 %v671, %v729
      %v744 = vmul.f32 %v672, %v736
      %v745 = vrcp.pop %v737
      %v746 = vmul.f32 %v643, %v745
      %v747 = vrcp.pop %v738
      %v748 = vmul.f32 %v646, %v747
      %v749 = vrcp.pop %v739
      %v750 = vmul.f32 %v649, %v749
      %v751 = vrcp.pop %v740
      %v752 = vmul.f32 %v652, %v751
      %v753 = vrcp.pop %v741
      %v754 = vmul.f32 %v655, %v753
      %v755 = vrcp.pop %v742
      %v756 = vmul.f32 %v658, %v755
      %v757 = vrcp.pop %v743
      %v758 = vmul.f32 %v661, %v757
      %v759 = vrcp.pop %v744
      %v760 = vmul.f32 %v664, %v759
      %v761 = vmul.f32 %v282, %v746
      %v762 = vmul.f32 %v287, %v748
      %v763 = vmul.f32 %v292, %v750
      %v764 = vmul.f32 %v297, %v752
      %v765 = vmul.f32 %v302, %v754
      %v766 = vmul.f32 %v307, %v756
      %v767 = vmul.f32 %v312, %v758
      %v768 = vmul.f32 %v317, %v760
      %769 = vrot.lane.b32.xlu0 %v320, 80
      %v770 = vpop.permute.xlu0 %769
      %771 = vrot.lane.b32.xlu0 %v321, 80
      %v772 = vpop.permute.xlu0 %771
      %773 = vrot.lane.b32.xlu0 %v322, 80
      %v774 = vpop.permute.xlu0 %773
      %775 = vrot.lane.b32.xlu0 %v323, 80
      %v776 = vpop.permute.xlu0 %775
      %777 = vrot.lane.b32.xlu0 %v324, 80
      %v778 = vpop.permute.xlu0 %777
      %779 = vrot.lane.b32.xlu0 %v325, 80
      %v780 = vpop.permute.xlu0 %779
      %781 = vrot.lane.b32.xlu0 %v326, 80
      %v782 = vpop.permute.xlu0 %781
      %783 = vrot.lane.b32.xlu0 %v327, 80
      %v784 = vpop.permute.xlu0 %783
      %v793 = vsel %vm328, %v770, 0.0
      %794 = vadd.xlane.f32.xlu0 %v793
      %v795 = vpop.xlane.xlu0 %794
      %v796 = vsel %vm328, %v772, 0.0
      %797 = vadd.xlane.f32.xlu0 %v796
      %v798 = vpop.xlane.xlu0 %797
      %v799 = vsel %vm328, %v774, 0.0
      %800 = vadd.xlane.f32.xlu0 %v799
      %v801 = vpop.xlane.xlu0 %800
      %v802 = vsel %vm328, %v776, 0.0
      %803 = vadd.xlane.f32.xlu0 %v802
      %v804 = vpop.xlane.xlu0 %803
      %v805 = vsel %vm328, %v778, 0.0
      %806 = vadd.xlane.f32.xlu0 %v805
      %v807 = vpop.xlane.xlu0 %806
      %v808 = vsel %vm328, %v780, 0.0
      %809 = vadd.xlane.f32.xlu0 %v808
      %v810 = vpop.xlane.xlu0 %809
      %v811 = vsel %vm328, %v782, 0.0
      %812 = vadd.xlane.f32.xlu0 %v811
      %v813 = vpop.xlane.xlu0 %812
      %v814 = vsel %vm328, %v784, 0.0
      %815 = vadd.xlane.f32.xlu0 %v814
      %v816 = vpop.xlane.xlu0 %815
      %v817 = vadd.f32 %v795, 1.0
      %v818 = vadd.f32 %v798, 1.0
      %v819 = vadd.f32 %v801, 1.0
      %v820 = vadd.f32 %v804, 1.0
      %v821 = vadd.f32 %v807, 1.0
      %v822 = vadd.f32 %v810, 1.0
      %v823 = vadd.f32 %v813, 1.0
      %v824 = vadd.f32 %v816, 1.0
      %v825 = vadd.f32 %v795, 1e-07
      %v826 = vadd.f32 %v798, 1e-07
      %v827 = vadd.f32 %v801, 1e-07
      %v828 = vadd.f32 %v804, 1e-07
      %v829 = vadd.f32 %v807, 1e-07
      %v830 = vadd.f32 %v810, 1e-07
      %v831 = vadd.f32 %v813, 1e-07
      %v832 = vadd.f32 %v816, 1e-07
      %v833 = vrsqrt.pop %v825
      %v834 = vmul.f32 %v825, %v833
      %vm835 = vcmp.eq.f32.partialorder %v825, inf
      %v836 = vsel %vm835, %v825, %v834
      %vm837 = vcmp.eq.f32.partialorder %v825, 0.0
      %v838 = vand.u32 %v825, 2147483648
      %v839 = vsel %vm837, %v838, %v836
      %v840 = vrsqrt.pop %v826
      %v841 = vmul.f32 %v826, %v840
      %vm842 = vcmp.eq.f32.partialorder %v826, inf
      %v843 = vsel %vm842, %v826, %v841
      %vm844 = vcmp.eq.f32.partialorder %v826, 0.0
      %v845 = vand.u32 %v826, 2147483648
      %v846 = vsel %vm844, %v845, %v843
      %v847 = vrsqrt.pop %v827
      %v848 = vmul.f32 %v827, %v847
      %vm849 = vcmp.eq.f32.partialorder %v827, inf
      %v850 = vsel %vm849, %v827, %v848
      %vm851 = vcmp.eq.f32.partialorder %v827, 0.0
      %v852 = vand.u32 %v827, 2147483648
      %v853 = vsel %vm851, %v852, %v850
      %v854 = vrsqrt.pop %v828
      %v855 = vmul.f32 %v828, %v854
      %vm856 = vcmp.eq.f32.partialorder %v828, inf
      %v857 = vsel %vm856, %v828, %v855
      %vm858 = vcmp.eq.f32.partialorder %v828, 0.0
      %v859 = vand.u32 %v828, 2147483648
      %v860 = vsel %vm858, %v859, %v857
      %v861 = vrsqrt.pop %v829
      %v862 = vmul.f32 %v829, %v861
      %vm863 = vcmp.eq.f32.partialorder %v829, inf
      %v864 = vsel %vm863, %v829, %v862
      %vm865 = vcmp.eq.f32.partialorder %v829, 0.0
      %v866 = vand.u32 %v829, 2147483648
      %v867 = vsel %vm865, %v866, %v864
      %v868 = vrsqrt.pop %v830
      %v869 = vmul.f32 %v830, %v868
      %vm870 = vcmp.eq.f32.partialorder %v830, inf
      %v871 = vsel %vm870, %v830, %v869
      %vm872 = vcmp.eq.f32.partialorder %v830, 0.0
      %v873 = vand.u32 %v830, 2147483648
      %v874 = vsel %vm872, %v873, %v871
      %v875 = vrsqrt.pop %v831
      %v876 = vmul.f32 %v831, %v875
      %vm877 = vcmp.eq.f32.partialorder %v831, inf
      %v878 = vsel %vm877, %v831, %v876
      %vm879 = vcmp.eq.f32.partialorder %v831, 0.0
      %v880 = vand.u32 %v831, 2147483648
      %v881 = vsel %vm879, %v880, %v878
      %v882 = vrsqrt.pop %v832
      %v883 = vmul.f32 %v832, %v882
      %vm884 = vcmp.eq.f32.partialorder %v832, inf
      %v885 = vsel %vm884, %v832, %v883
      %vm886 = vcmp.eq.f32.partialorder %v832, 0.0
      %v887 = vand.u32 %v832, 2147483648
      %v888 = vsel %vm886, %v887, %v885
      %v889 = vmul.f32 %v817, %v839
      %v890 = vmul.f32 %v818, %v846
      %v891 = vmul.f32 %v819, %v853
      %v892 = vmul.f32 %v820, %v860
      %v893 = vmul.f32 %v821, %v867
      %v894 = vmul.f32 %v822, %v874
      %v895 = vmul.f32 %v823, %v881
      %v896 = vmul.f32 %v824, %v888
      %v897 = vrcp.pop %v889
      %v898 = vmul.f32 %v795, %v897
      %v899 = vrcp.pop %v890
      %v900 = vmul.f32 %v798, %v899
      %v901 = vrcp.pop %v891
      %v902 = vmul.f32 %v801, %v901
      %v903 = vrcp.pop %v892
      %v904 = vmul.f32 %v804, %v903
      %v905 = vrcp.pop %v893
      %v906 = vmul.f32 %v807, %v905
      %v907 = vrcp.pop %v894
      %v908 = vmul.f32 %v810, %v907
      %v909 = vrcp.pop %v895
      %v910 = vmul.f32 %v813, %v909
      %v911 = vrcp.pop %v896
      %v912 = vmul.f32 %v816, %v911
      %v913 = vmul.f32 %v282, %v898
      %v914 = vmul.f32 %v287, %v900
      %v915 = vmul.f32 %v292, %v902
      %v916 = vmul.f32 %v297, %v904
      %v917 = vmul.f32 %v302, %v906
      %v918 = vmul.f32 %v307, %v908
      %v919 = vmul.f32 %v312, %v910
      %v920 = vmul.f32 %v317, %v912
      %921 = vrot.lane.b32.xlu0 %v320, 64
      %v922 = vpop.permute.xlu0 %921
      %923 = vrot.lane.b32.xlu0 %v321, 64
      %v924 = vpop.permute.xlu0 %923
      %925 = vrot.lane.b32.xlu0 %v322, 64
      %v926 = vpop.permute.xlu0 %925
      %927 = vrot.lane.b32.xlu0 %v323, 64
      %v928 = vpop.permute.xlu0 %927
      %929 = vrot.lane.b32.xlu0 %v324, 64
      %v930 = vpop.permute.xlu0 %929
      %931 = vrot.lane.b32.xlu0 %v325, 64
      %v932 = vpop.permute.xlu0 %931
      %933 = vrot.lane.b32.xlu0 %v326, 64
      %v934 = vpop.permute.xlu0 %933
      %935 = vrot.lane.b32.xlu0 %v327, 64
      %v936 = vpop.permute.xlu0 %935
      %v945 = vsel %vm328, %v922, 0.0
      %946 = vadd.xlane.f32.xlu0 %v945
      %v947 = vpop.xlane.xlu0 %946
      %v948 = vsel %vm328, %v924, 0.0
      %949 = vadd.xlane.f32.xlu0 %v948
      %v950 = vpop.xlane.xlu0 %949
      %v951 = vsel %vm328, %v926, 0.0
      %952 = vadd.xlane.f32.xlu0 %v951
      %v953 = vpop.xlane.xlu0 %952
      %v954 = vsel %vm328, %v928, 0.0
      %955 = vadd.xlane.f32.xlu0 %v954
      %v956 = vpop.xlane.xlu0 %955
      %v957 = vsel %vm328, %v930, 0.0
      %958 = vadd.xlane.f32.xlu0 %v957
      %v959 = vpop.xlane.xlu0 %958
      %v960 = vsel %vm328, %v932, 0.0
      %961 = vadd.xlane.f32.xlu0 %v960
      %v962 = vpop.xlane.xlu0 %961
      %v963 = vsel %vm328, %v934, 0.0
      %964 = vadd.xlane.f32.xlu0 %v963
      %v965 = vpop.xlane.xlu0 %964
      %v966 = vsel %vm328, %v936, 0.0
      %967 = vadd.xlane.f32.xlu0 %v966
      %v968 = vpop.xlane.xlu0 %967
      %v969 = vadd.f32 %v947, 1.0
      %v970 = vadd.f32 %v950, 1.0
      %v971 = vadd.f32 %v953, 1.0
      %v972 = vadd.f32 %v956, 1.0
      %v973 = vadd.f32 %v959, 1.0
      %v974 = vadd.f32 %v962, 1.0
      %v975 = vadd.f32 %v965, 1.0
      %v976 = vadd.f32 %v968, 1.0
      %v977 = vadd.f32 %v947, 1e-07
      %v978 = vadd.f32 %v950, 1e-07
      %v979 = vadd.f32 %v953, 1e-07
      %v980 = vadd.f32 %v956, 1e-07
      %v981 = vadd.f32 %v959, 1e-07
      %v982 = vadd.f32 %v962, 1e-07
      %v983 = vadd.f32 %v965, 1e-07
      %v984 = vadd.f32 %v968, 1e-07
      %v985 = vrsqrt.pop %v977
      %v986 = vmul.f32 %v977, %v985
      %vm987 = vcmp.eq.f32.partialorder %v977, inf
      %v988 = vsel %vm987, %v977, %v986
      %vm989 = vcmp.eq.f32.partialorder %v977, 0.0
      %v990 = vand.u32 %v977, 2147483648
      %v991 = vsel %vm989, %v990, %v988
      %v992 = vrsqrt.pop %v978
      %v993 = vmul.f32 %v978, %v992
      %vm994 = vcmp.eq.f32.partialorder %v978, inf
      %v995 = vsel %vm994, %v978, %v993
      %vm996 = vcmp.eq.f32.partialorder %v978, 0.0
      %v997 = vand.u32 %v978, 2147483648
      %v998 = vsel %vm996, %v997, %v995
      %v999 = vrsqrt.pop %v979
      %v1000 = vmul.f32 %v979, %v999
      %vm1001 = vcmp.eq.f32.partialorder %v979, inf
      %v1002 = vsel %vm1001, %v979, %v1000
      %vm1003 = vcmp.eq.f32.partialorder %v979, 0.0
      %v1004 = vand.u32 %v979, 2147483648
      %v1005 = vsel %vm1003, %v1004, %v1002
      %v1006 = vrsqrt.pop %v980
      %v1007 = vmul.f32 %v980, %v1006
      %vm1008 = vcmp.eq.f32.partialorder %v980, inf
      %v1009 = vsel %vm1008, %v980, %v1007
      %vm1010 = vcmp.eq.f32.partialorder %v980, 0.0
      %v1011 = vand.u32 %v980, 2147483648
      %v1012 = vsel %vm1010, %v1011, %v1009
      %v1013 = vrsqrt.pop %v981
      %v1014 = vmul.f32 %v981, %v1013
      %vm1015 = vcmp.eq.f32.partialorder %v981, inf
      %v1016 = vsel %vm1015, %v981, %v1014
      %vm1017 = vcmp.eq.f32.partialorder %v981, 0.0
      %v1018 = vand.u32 %v981, 2147483648
      %v1019 = vsel %vm1017, %v1018, %v1016
      %v1020 = vrsqrt.pop %v982
      %v1021 = vmul.f32 %v982, %v1020
      %vm1022 = vcmp.eq.f32.partialorder %v982, inf
      %v1023 = vsel %vm1022, %v982, %v1021
      %vm1024 = vcmp.eq.f32.partialorder %v982, 0.0
      %v1025 = vand.u32 %v982, 2147483648
      %v1026 = vsel %vm1024, %v1025, %v1023
      %v1027 = vrsqrt.pop %v983
      %v1028 = vmul.f32 %v983, %v1027
      %vm1029 = vcmp.eq.f32.partialorder %v983, inf
      %v1030 = vsel %vm1029, %v983, %v1028
      %vm1031 = vcmp.eq.f32.partialorder %v983, 0.0
      %v1032 = vand.u32 %v983, 2147483648
      %v1033 = vsel %vm1031, %v1032, %v1030
      %v1034 = vrsqrt.pop %v984
      %v1035 = vmul.f32 %v984, %v1034
      %vm1036 = vcmp.eq.f32.partialorder %v984, inf
      %v1037 = vsel %vm1036, %v984, %v1035
      %vm1038 = vcmp.eq.f32.partialorder %v984, 0.0
      %v1039 = vand.u32 %v984, 2147483648
      %v1040 = vsel %vm1038, %v1039, %v1037
      %v1041 = vmul.f32 %v969, %v991
      %v1042 = vmul.f32 %v970, %v998
      %v1043 = vmul.f32 %v971, %v1005
      %v1044 = vmul.f32 %v972, %v1012
      %v1045 = vmul.f32 %v973, %v1019
      %v1046 = vmul.f32 %v974, %v1026
      %v1047 = vmul.f32 %v975, %v1033
      %v1048 = vmul.f32 %v976, %v1040
      %v1049 = vrcp.pop %v1041
      %v1050 = vmul.f32 %v947, %v1049
      %v1051 = vrcp.pop %v1042
      %v1052 = vmul.f32 %v950, %v1051
      %v1053 = vrcp.pop %v1043
      %v1054 = vmul.f32 %v953, %v1053
      %v1055 = vrcp.pop %v1044
      %v1056 = vmul.f32 %v956, %v1055
      %v1057 = vrcp.pop %v1045
      %v1058 = vmul.f32 %v959, %v1057
      %v1059 = vrcp.pop %v1046
      %v1060 = vmul.f32 %v962, %v1059
      %v1061 = vrcp.pop %v1047
      %v1062 = vmul.f32 %v965, %v1061
      %v1063 = vrcp.pop %v1048
      %v1064 = vmul.f32 %v968, %v1063
      %v1065 = vmul.f32 %v282, %v1050
      %v1066 = vmul.f32 %v287, %v1052
      %v1067 = vmul.f32 %v292, %v1054
      %v1068 = vmul.f32 %v297, %v1056
      %v1069 = vmul.f32 %v302, %v1058
      %v1070 = vmul.f32 %v307, %v1060
      %v1071 = vmul.f32 %v312, %v1062
      %v1072 = vmul.f32 %v317, %v1064
      %1073 = vrot.lane.b32.xlu0 %v320, 48
      %v1074 = vpop.permute.xlu0 %1073
      %1075 = vrot.lane.b32.xlu0 %v321, 48
      %v1076 = vpop.permute.xlu0 %1075
      %1077 = vrot.lane.b32.xlu0 %v322, 48
      %v1078 = vpop.permute.xlu0 %1077
      %1079 = vrot.lane.b32.xlu0 %v323, 48
      %v1080 = vpop.permute.xlu0 %1079
      %1081 = vrot.lane.b32.xlu0 %v324, 48
      %v1082 = vpop.permute.xlu0 %1081
      %1083 = vrot.lane.b32.xlu0 %v325, 48
      %v1084 = vpop.permute.xlu0 %1083
      %1085 = vrot.lane.b32.xlu0 %v326, 48
      %v1086 = vpop.permute.xlu0 %1085
      %1087 = vrot.lane.b32.xlu0 %v327, 48
      %v1088 = vpop.permute.xlu0 %1087
      %v1097 = vsel %vm328, %v1074, 0.0
      %1098 = vadd.xlane.f32.xlu0 %v1097
      %v1099 = vpop.xlane.xlu0 %1098
      %v1100 = vsel %vm328, %v1076, 0.0
      %1101 = vadd.xlane.f32.xlu0 %v1100
      %v1102 = vpop.xlane.xlu0 %1101
      %v1103 = vsel %vm328, %v1078, 0.0
      %1104 = vadd.xlane.f32.xlu0 %v1103
      %v1105 = vpop.xlane.xlu0 %1104
      %v1106 = vsel %vm328, %v1080, 0.0
      %1107 = vadd.xlane.f32.xlu0 %v1106
      %v1108 = vpop.xlane.xlu0 %1107
      %v1109 = vsel %vm328, %v1082, 0.0
      %1110 = vadd.xlane.f32.xlu0 %v1109
      %v1111 = vpop.xlane.xlu0 %1110
      %v1112 = vsel %vm328, %v1084, 0.0
      %1113 = vadd.xlane.f32.xlu0 %v1112
      %v1114 = vpop.xlane.xlu0 %1113
      %v1115 = vsel %vm328, %v1086, 0.0
      %1116 = vadd.xlane.f32.xlu0 %v1115
      %v1117 = vpop.xlane.xlu0 %1116
      %v1118 = vsel %vm328, %v1088, 0.0
      %1119 = vadd.xlane.f32.xlu0 %v1118
      %v1120 = vpop.xlane.xlu0 %1119
      %v1121 = vadd.f32 %v1099, 1.0
      %v1122 = vadd.f32 %v1102, 1.0
      %v1123 = vadd.f32 %v1105, 1.0
      %v1124 = vadd.f32 %v1108, 1.0
      %v1125 = vadd.f32 %v1111, 1.0
      %v1126 = vadd.f32 %v1114, 1.0
      %v1127 = vadd.f32 %v1117, 1.0
      %v1128 = vadd.f32 %v1120, 1.0
      %v1129 = vadd.f32 %v1099, 1e-07
      %v1130 = vadd.f32 %v1102, 1e-07
      %v1131 = vadd.f32 %v1105, 1e-07
      %v1132 = vadd.f32 %v1108, 1e-07
      %v1133 = vadd.f32 %v1111, 1e-07
      %v1134 = vadd.f32 %v1114, 1e-07
      %v1135 = vadd.f32 %v1117, 1e-07
      %v1136 = vadd.f32 %v1120, 1e-07
      %v1137 = vrsqrt.pop %v1129
      %v1138 = vmul.f32 %v1129, %v1137
      %vm1139 = vcmp.eq.f32.partialorder %v1129, inf
      %v1140 = vsel %vm1139, %v1129, %v1138
      %vm1141 = vcmp.eq.f32.partialorder %v1129, 0.0
      %v1142 = vand.u32 %v1129, 2147483648
      %v1143 = vsel %vm1141, %v1142, %v1140
      %v1144 = vrsqrt.pop %v1130
      %v1145 = vmul.f32 %v1130, %v1144
      %vm1146 = vcmp.eq.f32.partialorder %v1130, inf
      %v1147 = vsel %vm1146, %v1130, %v1145
      %vm1148 = vcmp.eq.f32.partialorder %v1130, 0.0
      %v1149 = vand.u32 %v1130, 2147483648
      %v1150 = vsel %vm1148, %v1149, %v1147
      %v1151 = vrsqrt.pop %v1131
      %v1152 = vmul.f32 %v1131, %v1151
      %vm1153 = vcmp.eq.f32.partialorder %v1131, inf
      %v1154 = vsel %vm1153, %v1131, %v1152
      %vm1155 = vcmp.eq.f32.partialorder %v1131, 0.0
      %v1156 = vand.u32 %v1131, 2147483648
      %v1157 = vsel %vm1155, %v1156, %v1154
      %v1158 = vrsqrt.pop %v1132
      %v1159 = vmul.f32 %v1132, %v1158
      %vm1160 = vcmp.eq.f32.partialorder %v1132, inf
      %v1161 = vsel %vm1160, %v1132, %v1159
      %vm1162 = vcmp.eq.f32.partialorder %v1132, 0.0
      %v1163 = vand.u32 %v1132, 2147483648
      %v1164 = vsel %vm1162, %v1163, %v1161
      %v1165 = vrsqrt.pop %v1133
      %v1166 = vmul.f32 %v1133, %v1165
      %vm1167 = vcmp.eq.f32.partialorder %v1133, inf
      %v1168 = vsel %vm1167, %v1133, %v1166
      %vm1169 = vcmp.eq.f32.partialorder %v1133, 0.0
      %v1170 = vand.u32 %v1133, 2147483648
      %v1171 = vsel %vm1169, %v1170, %v1168
      %v1172 = vrsqrt.pop %v1134
      %v1173 = vmul.f32 %v1134, %v1172
      %vm1174 = vcmp.eq.f32.partialorder %v1134, inf
      %v1175 = vsel %vm1174, %v1134, %v1173
      %vm1176 = vcmp.eq.f32.partialorder %v1134, 0.0
      %v1177 = vand.u32 %v1134, 2147483648
      %v1178 = vsel %vm1176, %v1177, %v1175
      %v1179 = vrsqrt.pop %v1135
      %v1180 = vmul.f32 %v1135, %v1179
      %vm1181 = vcmp.eq.f32.partialorder %v1135, inf
      %v1182 = vsel %vm1181, %v1135, %v1180
      %vm1183 = vcmp.eq.f32.partialorder %v1135, 0.0
      %v1184 = vand.u32 %v1135, 2147483648
      %v1185 = vsel %vm1183, %v1184, %v1182
      %v1186 = vrsqrt.pop %v1136
      %v1187 = vmul.f32 %v1136, %v1186
      %vm1188 = vcmp.eq.f32.partialorder %v1136, inf
      %v1189 = vsel %vm1188, %v1136, %v1187
      %vm1190 = vcmp.eq.f32.partialorder %v1136, 0.0
      %v1191 = vand.u32 %v1136, 2147483648
      %v1192 = vsel %vm1190, %v1191, %v1189
      %v1193 = vmul.f32 %v1121, %v1143
      %v1194 = vmul.f32 %v1122, %v1150
      %v1195 = vmul.f32 %v1123, %v1157
      %v1196 = vmul.f32 %v1124, %v1164
      %v1197 = vmul.f32 %v1125, %v1171
      %v1198 = vmul.f32 %v1126, %v1178
      %v1199 = vmul.f32 %v1127, %v1185
      %v1200 = vmul.f32 %v1128, %v1192
      %v1201 = vrcp.pop %v1193
      %v1202 = vmul.f32 %v1099, %v1201
      %v1203 = vrcp.pop %v1194
      %v1204 = vmul.f32 %v1102, %v1203
      %v1205 = vrcp.pop %v1195
      %v1206 = vmul.f32 %v1105, %v1205
      %v1207 = vrcp.pop %v1196
      %v1208 = vmul.f32 %v1108, %v1207
      %v1209 = vrcp.pop %v1197
      %v1210 = vmul.f32 %v1111, %v1209
      %v1211 = vrcp.pop %v1198
      %v1212 = vmul.f32 %v1114, %v1211
      %v1213 = vrcp.pop %v1199
      %v1214 = vmul.f32 %v1117, %v1213
      %v1215 = vrcp.pop %v1200
      %v1216 = vmul.f32 %v1120, %v1215
      %v1217 = vmul.f32 %v282, %v1202
      %v1218 = vmul.f32 %v287, %v1204
      %v1219 = vmul.f32 %v292, %v1206
      %v1220 = vmul.f32 %v297, %v1208
      %v1221 = vmul.f32 %v302, %v1210
      %v1222 = vmul.f32 %v307, %v1212
      %v1223 = vmul.f32 %v312, %v1214
      %v1224 = vmul.f32 %v317, %v1216
      %1225 = vrot.lane.b32.xlu0 %v320, 32
      %v1226 = vpop.permute.xlu0 %1225
      %1227 = vrot.lane.b32.xlu0 %v321, 32
      %v1228 = vpop.permute.xlu0 %1227
      %1229 = vrot.lane.b32.xlu0 %v322, 32
      %v1230 = vpop.permute.xlu0 %1229
      %1231 = vrot.lane.b32.xlu0 %v323, 32
      %v1232 = vpop.permute.xlu0 %1231
      %1233 = vrot.lane.b32.xlu0 %v324, 32
      %v1234 = vpop.permute.xlu0 %1233
      %1235 = vrot.lane.b32.xlu0 %v325, 32
      %v1236 = vpop.permute.xlu0 %1235
      %1237 = vrot.lane.b32.xlu0 %v326, 32
      %v1238 = vpop.permute.xlu0 %1237
      %1239 = vrot.lane.b32.xlu0 %v327, 32
      %v1240 = vpop.permute.xlu0 %1239
      %v1249 = vsel %vm328, %v1226, 0.0
      %1250 = vadd.xlane.f32.xlu0 %v1249
      %v1251 = vpop.xlane.xlu0 %1250
      %v1252 = vsel %vm328, %v1228, 0.0
      %1253 = vadd.xlane.f32.xlu0 %v1252
      %v1254 = vpop.xlane.xlu0 %1253
      %v1255 = vsel %vm328, %v1230, 0.0
      %1256 = vadd.xlane.f32.xlu0 %v1255
      %v1257 = vpop.xlane.xlu0 %1256
      %v1258 = vsel %vm328, %v1232, 0.0
      %1259 = vadd.xlane.f32.xlu0 %v1258
      %v1260 = vpop.xlane.xlu0 %1259
      %v1261 = vsel %vm328, %v1234, 0.0
      %1262 = vadd.xlane.f32.xlu0 %v1261
      %v1263 = vpop.xlane.xlu0 %1262
      %v1264 = vsel %vm328, %v1236, 0.0
      %1265 = vadd.xlane.f32.xlu0 %v1264
      %v1266 = vpop.xlane.xlu0 %1265
      %v1267 = vsel %vm328, %v1238, 0.0
      %1268 = vadd.xlane.f32.xlu0 %v1267
      %v1269 = vpop.xlane.xlu0 %1268
      %v1270 = vsel %vm328, %v1240, 0.0
      %1271 = vadd.xlane.f32.xlu0 %v1270
      %v1272 = vpop.xlane.xlu0 %1271
      %v1273 = vadd.f32 %v1251, 1.0
      %v1274 = vadd.f32 %v1254, 1.0
      %v1275 = vadd.f32 %v1257, 1.0
      %v1276 = vadd.f32 %v1260, 1.0
      %v1277 = vadd.f32 %v1263, 1.0
      %v1278 = vadd.f32 %v1266, 1.0
      %v1279 = vadd.f32 %v1269, 1.0
      %v1280 = vadd.f32 %v1272, 1.0
      %v1281 = vadd.f32 %v1251, 1e-07
      %v1282 = vadd.f32 %v1254, 1e-07
      %v1283 = vadd.f32 %v1257, 1e-07
      %v1284 = vadd.f32 %v1260, 1e-07
      %v1285 = vadd.f32 %v1263, 1e-07
      %v1286 = vadd.f32 %v1266, 1e-07
      %v1287 = vadd.f32 %v1269, 1e-07
      %v1288 = vadd.f32 %v1272, 1e-07
      %v1289 = vrsqrt.pop %v1281
      %v1290 = vmul.f32 %v1281, %v1289
      %vm1291 = vcmp.eq.f32.partialorder %v1281, inf
      %v1292 = vsel %vm1291, %v1281, %v1290
      %vm1293 = vcmp.eq.f32.partialorder %v1281, 0.0
      %v1294 = vand.u32 %v1281, 2147483648
      %v1295 = vsel %vm1293, %v1294, %v1292
      %v1296 = vrsqrt.pop %v1282
      %v1297 = vmul.f32 %v1282, %v1296
      %vm1298 = vcmp.eq.f32.partialorder %v1282, inf
      %v1299 = vsel %vm1298, %v1282, %v1297
      %vm1300 = vcmp.eq.f32.partialorder %v1282, 0.0
      %v1301 = vand.u32 %v1282, 2147483648
      %v1302 = vsel %vm1300, %v1301, %v1299
      %v1303 = vrsqrt.pop %v1283
      %v1304 = vmul.f32 %v1283, %v1303
      %vm1305 = vcmp.eq.f32.partialorder %v1283, inf
      %v1306 = vsel %vm1305, %v1283, %v1304
      %vm1307 = vcmp.eq.f32.partialorder %v1283, 0.0
      %v1308 = vand.u32 %v1283, 2147483648
      %v1309 = vsel %vm1307, %v1308, %v1306
      %v1310 = vrsqrt.pop %v1284
      %v1311 = vmul.f32 %v1284, %v1310
      %vm1312 = vcmp.eq.f32.partialorder %v1284, inf
      %v1313 = vsel %vm1312, %v1284, %v1311
      %vm1314 = vcmp.eq.f32.partialorder %v1284, 0.0
      %v1315 = vand.u32 %v1284, 2147483648
      %v1316 = vsel %vm1314, %v1315, %v1313
      %v1317 = vrsqrt.pop %v1285
      %v1318 = vmul.f32 %v1285, %v1317
      %vm1319 = vcmp.eq.f32.partialorder %v1285, inf
      %v1320 = vsel %vm1319, %v1285, %v1318
      %vm1321 = vcmp.eq.f32.partialorder %v1285, 0.0
      %v1322 = vand.u32 %v1285, 2147483648
      %v1323 = vsel %vm1321, %v1322, %v1320
      %v1324 = vrsqrt.pop %v1286
      %v1325 = vmul.f32 %v1286, %v1324
      %vm1326 = vcmp.eq.f32.partialorder %v1286, inf
      %v1327 = vsel %vm1326, %v1286, %v1325
      %vm1328 = vcmp.eq.f32.partialorder %v1286, 0.0
      %v1329 = vand.u32 %v1286, 2147483648
      %v1330 = vsel %vm1328, %v1329, %v1327
      %v1331 = vrsqrt.pop %v1287
      %v1332 = vmul.f32 %v1287, %v1331
      %vm1333 = vcmp.eq.f32.partialorder %v1287, inf
      %v1334 = vsel %vm1333, %v1287, %v1332
      %vm1335 = vcmp.eq.f32.partialorder %v1287, 0.0
      %v1336 = vand.u32 %v1287, 2147483648
      %v1337 = vsel %vm1335, %v1336, %v1334
      %v1338 = vrsqrt.pop %v1288
      %v1339 = vmul.f32 %v1288, %v1338
      %vm1340 = vcmp.eq.f32.partialorder %v1288, inf
      %v1341 = vsel %vm1340, %v1288, %v1339
      %vm1342 = vcmp.eq.f32.partialorder %v1288, 0.0
      %v1343 = vand.u32 %v1288, 2147483648
      %v1344 = vsel %vm1342, %v1343, %v1341
      %v1345 = vmul.f32 %v1273, %v1295
      %v1346 = vmul.f32 %v1274, %v1302
      %v1347 = vmul.f32 %v1275, %v1309
      %v1348 = vmul.f32 %v1276, %v1316
      %v1349 = vmul.f32 %v1277, %v1323
      %v1350 = vmul.f32 %v1278, %v1330
      %v1351 = vmul.f32 %v1279, %v1337
      %v1352 = vmul.f32 %v1280, %v1344
      %v1353 = vrcp.pop %v1345
      %v1354 = vmul.f32 %v1251, %v1353
      %v1355 = vrcp.pop %v1346
      %v1356 = vmul.f32 %v1254, %v1355
      %v1357 = vrcp.pop %v1347
      %v1358 = vmul.f32 %v1257, %v1357
      %v1359 = vrcp.pop %v1348
      %v1360 = vmul.f32 %v1260, %v1359
      %v1361 = vrcp.pop %v1349
      %v1362 = vmul.f32 %v1263, %v1361
      %v1363 = vrcp.pop %v1350
      %v1364 = vmul.f32 %v1266, %v1363
      %v1365 = vrcp.pop %v1351
      %v1366 = vmul.f32 %v1269, %v1365
      %v1367 = vrcp.pop %v1352
      %v1368 = vmul.f32 %v1272, %v1367
      %v1369 = vmul.f32 %v282, %v1354
      %v1370 = vmul.f32 %v287, %v1356
      %v1371 = vmul.f32 %v292, %v1358
      %v1372 = vmul.f32 %v297, %v1360
      %v1373 = vmul.f32 %v302, %v1362
      %v1374 = vmul.f32 %v307, %v1364
      %v1375 = vmul.f32 %v312, %v1366
      %v1376 = vmul.f32 %v317, %v1368
      %1377 = vrot.lane.b32.xlu0 %v320, 16
      %v1378 = vpop.permute.xlu0 %1377
      %1379 = vrot.lane.b32.xlu0 %v321, 16
      %v1380 = vpop.permute.xlu0 %1379
      %1381 = vrot.lane.b32.xlu0 %v322, 16
      %v1382 = vpop.permute.xlu0 %1381
      %1383 = vrot.lane.b32.xlu0 %v323, 16
      %v1384 = vpop.permute.xlu0 %1383
      %1385 = vrot.lane.b32.xlu0 %v324, 16
      %v1386 = vpop.permute.xlu0 %1385
      %1387 = vrot.lane.b32.xlu0 %v325, 16
      %v1388 = vpop.permute.xlu0 %1387
      %1389 = vrot.lane.b32.xlu0 %v326, 16
      %v1390 = vpop.permute.xlu0 %1389
      %1391 = vrot.lane.b32.xlu0 %v327, 16
      %v1392 = vpop.permute.xlu0 %1391
      %v1401 = vsel %vm328, %v1378, 0.0
      %1402 = vadd.xlane.f32.xlu0 %v1401
      %v1403 = vpop.xlane.xlu0 %1402
      %v1404 = vsel %vm328, %v1380, 0.0
      %1405 = vadd.xlane.f32.xlu0 %v1404
      %v1406 = vpop.xlane.xlu0 %1405
      %v1407 = vsel %vm328, %v1382, 0.0
      %1408 = vadd.xlane.f32.xlu0 %v1407
      %v1409 = vpop.xlane.xlu0 %1408
      %v1410 = vsel %vm328, %v1384, 0.0
      %1411 = vadd.xlane.f32.xlu0 %v1410
      %v1412 = vpop.xlane.xlu0 %1411
      %v1413 = vsel %vm328, %v1386, 0.0
      %1414 = vadd.xlane.f32.xlu0 %v1413
      %v1415 = vpop.xlane.xlu0 %1414
      %v1416 = vsel %vm328, %v1388, 0.0
      %1417 = vadd.xlane.f32.xlu0 %v1416
      %v1418 = vpop.xlane.xlu0 %1417
      %v1419 = vsel %vm328, %v1390, 0.0
      %1420 = vadd.xlane.f32.xlu0 %v1419
      %v1421 = vpop.xlane.xlu0 %1420
      %v1422 = vsel %vm328, %v1392, 0.0
      %1423 = vadd.xlane.f32.xlu0 %v1422
      %v1424 = vpop.xlane.xlu0 %1423
      %v1425 = vadd.f32 %v1403, 1.0
      %v1426 = vadd.f32 %v1406, 1.0
      %v1427 = vadd.f32 %v1409, 1.0
      %v1428 = vadd.f32 %v1412, 1.0
      %v1429 = vadd.f32 %v1415, 1.0
      %v1430 = vadd.f32 %v1418, 1.0
      %v1431 = vadd.f32 %v1421, 1.0
      %v1432 = vadd.f32 %v1424, 1.0
      %v1433 = vadd.f32 %v1403, 1e-07
      %v1434 = vadd.f32 %v1406, 1e-07
      %v1435 = vadd.f32 %v1409, 1e-07
      %v1436 = vadd.f32 %v1412, 1e-07
      %v1437 = vadd.f32 %v1415, 1e-07
      %v1438 = vadd.f32 %v1418, 1e-07
      %v1439 = vadd.f32 %v1421, 1e-07
      %v1440 = vadd.f32 %v1424, 1e-07
      %v1441 = vrsqrt.pop %v1433
      %v1442 = vmul.f32 %v1433, %v1441
      %vm1443 = vcmp.eq.f32.partialorder %v1433, inf
      %v1444 = vsel %vm1443, %v1433, %v1442
      %vm1445 = vcmp.eq.f32.partialorder %v1433, 0.0
      %v1446 = vand.u32 %v1433, 2147483648
      %v1447 = vsel %vm1445, %v1446, %v1444
      %v1448 = vrsqrt.pop %v1434
      %v1449 = vmul.f32 %v1434, %v1448
      %vm1450 = vcmp.eq.f32.partialorder %v1434, inf
      %v1451 = vsel %vm1450, %v1434, %v1449
      %vm1452 = vcmp.eq.f32.partialorder %v1434, 0.0
      %v1453 = vand.u32 %v1434, 2147483648
      %v1454 = vsel %vm1452, %v1453, %v1451
      %v1455 = vrsqrt.pop %v1435
      %v1456 = vmul.f32 %v1435, %v1455
      %vm1457 = vcmp.eq.f32.partialorder %v1435, inf
      %v1458 = vsel %vm1457, %v1435, %v1456
      %vm1459 = vcmp.eq.f32.partialorder %v1435, 0.0
      %v1460 = vand.u32 %v1435, 2147483648
      %v1461 = vsel %vm1459, %v1460, %v1458
      %v1462 = vrsqrt.pop %v1436
      %v1463 = vmul.f32 %v1436, %v1462
      %vm1464 = vcmp.eq.f32.partialorder %v1436, inf
      %v1465 = vsel %vm1464, %v1436, %v1463
      %vm1466 = vcmp.eq.f32.partialorder %v1436, 0.0
      %v1467 = vand.u32 %v1436, 2147483648
      %v1468 = vsel %vm1466, %v1467, %v1465
      %v1469 = vrsqrt.pop %v1437
      %v1470 = vmul.f32 %v1437, %v1469
      %vm1471 = vcmp.eq.f32.partialorder %v1437, inf
      %v1472 = vsel %vm1471, %v1437, %v1470
      %vm1473 = vcmp.eq.f32.partialorder %v1437, 0.0
      %v1474 = vand.u32 %v1437, 2147483648
      %v1475 = vsel %vm1473, %v1474, %v1472
      %v1476 = vrsqrt.pop %v1438
      %v1477 = vmul.f32 %v1438, %v1476
      %vm1478 = vcmp.eq.f32.partialorder %v1438, inf
      %v1479 = vsel %vm1478, %v1438, %v1477
      %vm1480 = vcmp.eq.f32.partialorder %v1438, 0.0
      %v1481 = vand.u32 %v1438, 2147483648
      %v1482 = vsel %vm1480, %v1481, %v1479
      %v1483 = vrsqrt.pop %v1439
      %v1484 = vmul.f32 %v1439, %v1483
      %vm1485 = vcmp.eq.f32.partialorder %v1439, inf
      %v1486 = vsel %vm1485, %v1439, %v1484
      %vm1487 = vcmp.eq.f32.partialorder %v1439, 0.0
      %v1488 = vand.u32 %v1439, 2147483648
      %v1489 = vsel %vm1487, %v1488, %v1486
      %v1490 = vrsqrt.pop %v1440
      %v1491 = vmul.f32 %v1440, %v1490
      %vm1492 = vcmp.eq.f32.partialorder %v1440, inf
      %v1493 = vsel %vm1492, %v1440, %v1491
      %vm1494 = vcmp.eq.f32.partialorder %v1440, 0.0
      %v1495 = vand.u32 %v1440, 2147483648
      %v1496 = vsel %vm1494, %v1495, %v1493
      %v1497 = vmul.f32 %v1425, %v1447
      %v1498 = vmul.f32 %v1426, %v1454
      %v1499 = vmul.f32 %v1427, %v1461
      %v1500 = vmul.f32 %v1428, %v1468
      %v1501 = vmul.f32 %v1429, %v1475
      %v1502 = vmul.f32 %v1430, %v1482
      %v1503 = vmul.f32 %v1431, %v1489
      %v1504 = vmul.f32 %v1432, %v1496
      %v1505 = vrcp.pop %v1497
      %v1506 = vmul.f32 %v1403, %v1505
      %v1507 = vrcp.pop %v1498
      %v1508 = vmul.f32 %v1406, %v1507
      %v1509 = vrcp.pop %v1499
      %v1510 = vmul.f32 %v1409, %v1509
      %v1511 = vrcp.pop %v1500
      %v1512 = vmul.f32 %v1412, %v1511
      %v1513 = vrcp.pop %v1501
      %v1514 = vmul.f32 %v1415, %v1513
      %v1515 = vrcp.pop %v1502
      %v1516 = vmul.f32 %v1418, %v1515
      %v1517 = vrcp.pop %v1503
      %v1518 = vmul.f32 %v1421, %v1517
      %v1519 = vrcp.pop %v1504
      %v1520 = vmul.f32 %v1424, %v1519
      %v1521 = vmul.f32 %v282, %v1506
      %v1522 = vmul.f32 %v287, %v1508
      %v1523 = vmul.f32 %v292, %v1510
      %v1524 = vmul.f32 %v297, %v1512
      %v1525 = vmul.f32 %v302, %v1514
      %v1526 = vmul.f32 %v307, %v1516
      %v1527 = vmul.f32 %v312, %v1518
      %v1528 = vmul.f32 %v317, %v1520
      %v1529 = vsel %vm328, %v449, %v609
      %v1530 = vsel %vm328, %v450, %v610
      %v1531 = vsel %vm328, %v451, %v611
      %v1532 = vsel %vm328, %v452, %v612
      %v1533 = vsel %vm328, %v453, %v613
      %v1534 = vsel %vm328, %v454, %v614
      %v1535 = vsel %vm328, %v455, %v615
      %v1536 = vsel %vm328, %v456, %v616
      %v1537 = vsel %vm190, %v1529, %v761
      %v1538 = vsel %vm190, %v1530, %v762
      %v1539 = vsel %vm190, %v1531, %v763
      %v1540 = vsel %vm190, %v1532, %v764
      %v1541 = vsel %vm190, %v1533, %v765
      %v1542 = vsel %vm190, %v1534, %v766
      %v1543 = vsel %vm190, %v1535, %v767
      %v1544 = vsel %vm190, %v1536, %v768
      %vm1545 = vcmask 392192
      %v1546 = vsel %vm1545, %v1537, %v913
      %v1547 = vsel %vm1545, %v1538, %v914
      %v1548 = vsel %vm1545, %v1539, %v915
      %v1549 = vsel %vm1545, %v1540, %v916
      %v1550 = vsel %vm1545, %v1541, %v917
      %v1551 = vsel %vm1545, %v1542, %v918
      %v1552 = vsel %vm1545, %v1543, %v919
      %v1553 = vsel %vm1545, %v1544, %v920
      %vm1554 = vcmask 523264
      %v1555 = vsel %vm1554, %v1546, %v1065
      %v1556 = vsel %vm1554, %v1547, %v1066
      %v1557 = vsel %vm1554, %v1548, %v1067
      %v1558 = vsel %vm1554, %v1549, %v1068
      %v1559 = vsel %vm1554, %v1550, %v1069
      %v1560 = vsel %vm1554, %v1551, %v1070
      %v1561 = vsel %vm1554, %v1552, %v1071
      %v1562 = vsel %vm1554, %v1553, %v1072
      %vm1563 = vcmask 654336
      %v1564 = vsel %vm1563, %v1555, %v1217
      %v1565 = vsel %vm1563, %v1556, %v1218
      %v1566 = vsel %vm1563, %v1557, %v1219
      %v1567 = vsel %vm1563, %v1558, %v1220
      %v1568 = vsel %vm1563, %v1559, %v1221
      %v1569 = vsel %vm1563, %v1560, %v1222
      %v1570 = vsel %vm1563, %v1561, %v1223
      %v1571 = vsel %vm1563, %v1562, %v1224
      %vm1572 = vcmask 785408
      %v1573 = vsel %vm1572, %v1564, %v1369
      %v1574 = vsel %vm1572, %v1565, %v1370
      %v1575 = vsel %vm1572, %v1566, %v1371
      %v1576 = vsel %vm1572, %v1567, %v1372
      %v1577 = vsel %vm1572, %v1568, %v1373
      %v1578 = vsel %vm1572, %v1569, %v1374
      %v1579 = vsel %vm1572, %v1570, %v1375
      %v1580 = vsel %vm1572, %v1571, %v1376
      %vm1581 = vcmask 916480
      %v1582 = vsel %vm1581, %v1573, %v1521
      %v1583 = vsel %vm1581, %v1574, %v1522
      %v1584 = vsel %vm1581, %v1575, %v1523
      %v1585 = vsel %vm1581, %v1576, %v1524
      %v1586 = vsel %vm1581, %v1577, %v1525
      %v1587 = vsel %vm1581, %v1578, %v1526
      %v1588 = vsel %vm1581, %v1579, %v1527
      %v1589 = vsel %vm1581, %v1580, %v1528
      %1590 = vst [vmem:[%s170] sm:$0xff] %v1582
      %1591 = vst [vmem:[%s170 + $0x8] sm:$0xff] %v1583
      %1592 = vst [vmem:[%s170 + $0x10] sm:$0xff] %v1584
      %1593 = vst [vmem:[%s170 + $0x18] sm:$0xff] %v1585
      %1594 = vst [vmem:[%s170 + $0x20] sm:$0xff] %v1586
      %1595 = vst [vmem:[%s170 + $0x28] sm:$0xff] %v1587
      %1596 = vst [vmem:[%s170 + $0x30] sm:$0xff] %v1588
      %1597 = vst [vmem:[%s170 + $0x38] sm:$0xff] %v1589
      %p1598 = scmp.lt.s32.totalorder %s14, 1
      %s1599 = scalar_select %p1598, %s14, 1
      %s1600 = smul.addr %s1599, 8
      %s1601 = smul.addr %s1600, 8
      %s1602 = scalar_lea.vmem %s3, %s1601
      // Predicated region
      $region33: #{get_abstract_caps_up.1} parent=31 // pred_check
        %p1603 = pneg %p100
      $region34: #{get_abstract_caps_up.1} parent=31 // pred_check_branch
        %1605 = sbr.rel (%p1603) target = $region36
      $region35: #{get_abstract_caps_up.1} parent=31 // pred_region
        _
      $region36: #{get_abstract_caps_up.1} parent=31 // pred_fallthru
        _
    $region32: #{get_abstract_caps_up.1} parent=5 // pred_fallthru
      _
    %p1606 = scmp.le.s32.totalorder 2, %s9
    // Predicated region
    $region37: #{get_abstract_caps_up.1} parent=5 // pred_check
      %p1607 = pneg %p1606
    $region38: #{get_abstract_caps_up.1} parent=5 // pred_check_branch
      %1609 = sbr.rel (%p1607) target = $region40
    $region39: #{get_abstract_caps_up.1} parent=5 // pred_region
      %s1610 = ssub.s32 %s9, 2
      // Predicated region
      $region41: #{get_abstract_caps_up.1} parent=39 // pred_check
        %p1611 = pneg %p106
      $region42: #{get_abstract_caps_up.1} parent=39 // pred_check_branch
        %1613 = sbr.rel (%p1611) target = $region44
      $region43: #{get_abstract_caps_up.1} parent=39 // pred_region
        %p1614 = scmp.lt.s32.totalorder %s15, 1
        %s1615 = scalar_select %p1614, %s15, 1
        %s1616 = smul.addr %s1615, 8
        %s1617 = smul.addr %s1616, 8
        %s1618 = scalar_lea.vmem %s3, %s1617
      $region44: #{get_abstract_caps_up.1} parent=39 // pred_fallthru
        _
    $region40: #{get_abstract_caps_up.1} parent=5 // pred_fallthru
      _
  $region6: #{get_abstract_caps_up.1} parent=0 // loop_footer
    %s13 = sadd.s32 1, %s9
  $region7: #{get_abstract_caps_up.1} parent=0 // loop_footer_branch
    %8 = sbr.rel target = $region3
  $region8: #{get_abstract_caps_up.1} parent=0 // loop_exit
    _

</llo_original>
